<compile_context>
chip_gen: v7x
topology: tpu7x:2x2x1
jax: 0.10.0
libtpu: 0.0.40
codegen_flags: <defaults>
</compile_context>

<pallas_src>
import jax
import jax.numpy as jnp
from jax.experimental import pallas as pl
from jax.experimental.pallas import tpu as pltpu

# ---- problem sizes (small, consistent with the module) ----------------------
B = 2          # batch
L = 16         # q_len
D_MODEL = 32
N_HEADS = 4
D_K = D_MODEL // N_HEADS
D_FF = 64
N_LAYERS = 2
BN_EPS = 1e-5
INV_SQRT2 = 0.7071067811865476
T = B * L      # flat token count


# ---- in-kernel helpers (python-float constants only -> no captures) ----------
def _erf(x):
    # Abramowitz & Stegun 7.1.26 polynomial (|err| <= 1.5e-7).
    # TODO(synk): switch to a native erf if/when Mosaic exposes one on the EUP.
    a1, a2, a3, a4, a5 = 0.254829592, -0.284496736, 1.421413741, -1.453152027, 1.061405429
    p = 0.3275911
    s = jnp.where(x >= 0.0, 1.0, -1.0)
    z = jnp.abs(x)
    t = 1.0 / (1.0 + p * z)
    poly = ((((a5 * t + a4) * t + a3) * t + a2) * t + a1) * t
    return s * (1.0 - poly * jnp.exp(-z * z))


def _gelu_exact(x):
    # PyTorch nn.GELU() default (erf-based).
    return 0.5 * x * (1.0 + _erf(x * INV_SQRT2))


def _batchnorm_mxu(x, ones_row, gamma, beta):
    # Training-mode BatchNorm1d over the d_model channel across all B*L tokens.
    # Column sums of [x, x*x] in one MXU pass (f32 operands for accurate stats).
    n_tok = x.shape[0]
    xx = jnp.concatenate([x, x * x], axis=1)                               # [T, 2D]
    s = jnp.dot(ones_row, xx, preferred_element_type=jnp.float32)          # [1, 2D]
    mean = s[:, :D_MODEL] * (1.0 / n_tok)
    var = s[:, D_MODEL:] * (1.0 / n_tok) - mean * mean                     # biased var
    a = gamma * jax.lax.rsqrt(var + BN_EPS)
    return x * a + (beta - mean * a)


# ---- Pallas kernel: whole encoder stack in one gridless invocation -----------
def tst_encoder_kernel(x_ref,
                       wqkv_ref, bqkv_ref, wo_ref, bo_ref,
                       g1_ref, be1_ref, w1_ref, bf1_ref, w2_ref, bf2_ref,
                       g2_ref, be2_ref,
                       add_mask_ref, head_mask_ref, ones_blk_ref, ones_row_ref,
                       o_ref):
    x = x_ref[...]                       # [T, D]     f32
    add_mask = add_mask_ref[...]         # [T, H*T]   0 / -1e30 (cross-batch mask)
    head_mask = head_mask_ref[...]       # [H*T, D]   block-diagonal head selector
    ones_blk = ones_blk_ref[...]         # [H*T, H*T] block ones (per-head softmax sums)
    ones_row = ones_row_ref[...]         # [1, T]     ones (BN column sums)
    n_layers = wqkv_ref.shape[0]

    for l in range(n_layers):
        # ---- multi-head self-attention -------------------------------------
        # Fused QKV projection (1/sqrt(d_k) pre-folded into the Q columns).
        qkv = jnp.dot(x.astype(jnp.bfloat16), wqkv_ref[l],
                      preferred_element_type=jnp.float32) + bqkv_ref[l]     # [T, 3D]
        q = qkv[:, :D_MODEL]
        k = qkv[:, D_MODEL:2 * D_MODEL]
        v = qkv[:, 2 * D_MODEL:]

        # Block-diagonal (head-masked) K/V replicas -> lane-dense attention.
        k_exp = jnp.concatenate([k] * N_HEADS, axis=0) * head_mask          # [H*T, D]
        v_exp = jnp.concatenate([v] * N_HEADS, axis=0) * head_mask          # [H*T, D]

        # All-head scores in one matmul: column block h == head h's [T, T] scores.
        s = jnp.einsum('td,kd->tk',
                       q.astype(jnp.bfloat16), k_exp.astype(jnp.bfloat16),
                       preferred_element_type=jnp.float32)                  # [T, H*T]
        s = s + add_mask
        # One whole-row max (valid for every head block: softmax shift-invariance).
        s = s - jnp.max(s, axis=-1, keepdims=True)
        e = jnp.exp(s)                                                      # masked -> 0
        # Per-head row sums via the MXU (broadcast within each head block).
        denom = jnp.dot(e, ones_blk, preferred_element_type=jnp.float32)    # [T, H*T]
        p = e * pl.reciprocal(denom, approx=True)
        # Contexts for all heads, already concatenated along d_model.
        ctx = jnp.dot(p.astype(jnp.bfloat16), v_exp.astype(jnp.bfloat16),
                      preferred_element_type=jnp.float32)                   # [T, D]

        attn_out = jnp.dot(ctx.astype(jnp.bfloat16), wo_ref[l],
                           preferred_element_type=jnp.float32) + bo_ref[l]

        x = _batchnorm_mxu(x + attn_out, ones_row, g1_ref[l], be1_ref[l])   # norm_attn

        # ---- position-wise feed-forward -------------------------------------
        h1 = _gelu_exact(jnp.dot(x.astype(jnp.bfloat16), w1_ref[l],
                                 preferred_element_type=jnp.float32) + bf1_ref[l])
        ff = jnp.dot(h1.astype(jnp.bfloat16), w2_ref[l],
                     preferred_element_type=jnp.float32) + bf2_ref[l]
        x = _batchnorm_mxu(x + ff, ones_row, g2_ref[l], be2_ref[l])         # norm_ffn

    o_ref[...] = x


# ---- one-time (offline) weight fusion & constant construction ----------------
def fuse_params(params):
    """Pre-fuse per-head weights into lane-dense matrices. Runs ONCE, not per call."""
    (wq, bq, wk, bk, wv, bv, wo, bo, g1, be1, w1, bf1, w2, bf2, g2, be2) = params
    nl = wq.shape[0]
    scale = 1.0 / (D_K ** 0.5)

    def fuse_w(w):   # [nl, H, D, dk] -> [nl, D, H*dk], column = h*dk + j
        return jnp.transpose(w, (0, 2, 1, 3)).reshape(nl, D_MODEL, N_HEADS * D_K)

    def fuse_b(b):   # [nl, H, 1, dk] -> [nl, 1, H*dk]
        return jnp.transpose(b, (0, 2, 1, 3)).reshape(nl, 1, N_HEADS * D_K)

    # Fold the 1/sqrt(d_k) attention scale into the Q columns (weights + bias).
    wqkv = jnp.concatenate([fuse_w(wq) * scale, fuse_w(wk), fuse_w(wv)], axis=-1)
    bqkv = jnp.concatenate([fuse_b(bq) * scale, fuse_b(bk), fuse_b(bv)], axis=-1)
    wo_f = wo.reshape(nl, N_HEADS * D_K, D_MODEL)          # concat heads along in-dim

    # MXU operands in bf16 (f32 accumulation in-kernel); biases / BN params in f32.
    return (wqkv.astype(jnp.bfloat16), bqkv.astype(jnp.float32),
            wo_f.astype(jnp.bfloat16), bo.astype(jnp.float32),
            g1.astype(jnp.float32), be1.astype(jnp.float32),
            w1.astype(jnp.bfloat16), bf1.astype(jnp.float32),
            w2.astype(jnp.bfloat16), bf2.astype(jnp.float32),
            g2.astype(jnp.float32), be2.astype(jnp.float32))


def make_consts():
    """Precompute attention / head-block masks on the host (passed to the kernel)."""
    tok = jnp.arange(T)
    same_batch = (tok[:, None] // L) == (tok[None, :] // L)                  # [T, T]
    add_mask = jnp.where(same_batch, 0.0, -1e30).astype(jnp.float32)         # [T, T]
    add_mask = jnp.tile(add_mask, (1, N_HEADS))                              # [T, H*T]
    head_of_row = jnp.arange(N_HEADS * T) // T                               # [H*T]
    head_of_col = jnp.arange(D_MODEL) // D_K                                 # [D]
    head_mask = (head_of_row[:, None] == head_of_col[None, :]).astype(jnp.float32)  # [H*T, D]
    ones_blk = (head_of_row[:, None] == head_of_row[None, :]).astype(jnp.float32)   # [H*T, H*T]
    ones_row = jnp.ones((1, T), jnp.float32)
    return add_mask, head_mask, ones_blk, ones_row


# ---- jitted forward: a single pallas_call -------------------------------------
@jax.jit
def tst_encoder_pallas(x, fused, consts):
    x2d = x.reshape(T, D_MODEL)
    vmem = pl.BlockSpec(memory_space=pltpu.MemorySpace.VMEM)
    n_in = 1 + len(fused) + len(consts)
    out2d = pl.pallas_call(
        tst_encoder_kernel,
        out_shape=jax.ShapeDtypeStruct((T, D_MODEL), jnp.float32),
        in_specs=[vmem] * n_in,
        out_specs=vmem,
        input_output_aliases={0: 0},   # reuse the x buffer as the output buffer
    )(x2d, *fused, *consts)
    return out2d.reshape(B, L, D_MODEL)


# ---- plain-JAX reference (for correctness check) ------------------------------
def tst_encoder_ref(x, params):
    (wq, bq, wk, bk, wv, bv, wo, bo, g1, be1, w1, bf1, w2, bf2, g2, be2) = params
    scale = 1.0 / (D_K ** 0.5)

    def bn(x, g, b):
        mean = jnp.mean(x, axis=(0, 1), keepdims=True)
        var = jnp.mean(jnp.square(x - mean), axis=(0, 1), keepdims=True)
        return (x - mean) / jnp.sqrt(var + BN_EPS) * g + b

    for l in range(wq.shape[0]):
        attn_out = jnp.zeros_like(x)
        for h in range(N_HEADS):
            qh = x @ wq[l, h] + bq[l, h]
            kh = x @ wk[l, h] + bk[l, h]
            vh = x @ wv[l, h] + bv[l, h]
            s = jnp.einsum('bqd,bkd->bqk', qh, kh) * scale
            p = jax.nn.softmax(s, axis=-1)
            oh = jnp.einsum('bqk,bkd->bqd', p, vh)
            attn_out = attn_out + oh @ wo[l, h]
        attn_out = attn_out + bo[l]
        x = bn(x + attn_out, g1[l], be1[l])
        h1 = jax.nn.gelu(x @ w1[l] + bf1[l], approximate=False)
        x = bn(x + (h1 @ w2[l] + bf2[l]), g2[l], be2[l])
    return x


# ---- deterministic synthetic parameters ---------------------------------------
def make_params(key):
    ks = jax.random.split(key, 16)

    def nrm(k, shape, scale=0.1):
        return (scale * jax.random.normal(k, shape)).astype(jnp.float32)

    wq = nrm(ks[0], (N_LAYERS, N_HEADS, D_MODEL, D_K))
    bq = nrm(ks[1], (N_LAYERS, N_HEADS, 1, D_K))
    wk = nrm(ks[2], (N_LAYERS, N_HEADS, D_MODEL, D_K))
    bk = nrm(ks[3], (N_LAYERS, N_HEADS, 1, D_K))
    wv = nrm(ks[4], (N_LAYERS, N_HEADS, D_MODEL, D_K))
    bv = nrm(ks[5], (N_LAYERS, N_HEADS, 1, D_K))
    wo = nrm(ks[6], (N_LAYERS, N_HEADS, D_K, D_MODEL))
    bo = nrm(ks[7], (N_LAYERS, 1, D_MODEL))
    g1 = 1.0 + nrm(ks[8], (N_LAYERS, 1, D_MODEL))
    be1 = nrm(ks[9], (N_LAYERS, 1, D_MODEL))
    w1 = nrm(ks[10], (N_LAYERS, D_MODEL, D_FF))
    bf1 = nrm(ks[11], (N_LAYERS, 1, D_FF))
    w2 = nrm(ks[12], (N_LAYERS, D_FF, D_MODEL))
    bf2 = nrm(ks[13], (N_LAYERS, 1, D_MODEL))
    g2 = 1.0 + nrm(ks[14], (N_LAYERS, 1, D_MODEL))
    be2 = nrm(ks[15], (N_LAYERS, 1, D_MODEL))
    return (wq, bq, wk, bk, wv, bv, wo, bo, g1, be1, w1, bf1, w2, bf2, g2, be2)


if __name__ == "__main__":
    key = jax.random.PRNGKey(0)
    kx, kp = jax.random.split(key)
    x = jax.random.normal(kx, (B, L, D_MODEL), dtype=jnp.float32)
    params = make_params(kp)

    # One-time setup (hoisted out of the per-call forward path).
    fused = fuse_params(params)
    consts = make_consts()

    out = tst_encoder_pallas(x, fused, consts)
    out = jax.block_until_ready(out)

    ref = tst_encoder_ref(x, params)
    assert out.shape == (B, L, D_MODEL)
    # bf16 MXU operands + approx softmax reciprocal in the kernel vs. a pure
    # f32 reference: a few 1e-3 of rounding per layer; 3e-2 bounds it with margin.
    assert jnp.allclose(out, ref, atol=3e-2, rtol=3e-2), (
        f"max abs err = {float(jnp.max(jnp.abs(out - ref)))}")

    print("KERNEL_OK")
</pallas_src>

<mosaic_0001>
module attributes {stable_mosaic.version = 11 : i64} {
  func.func @tst_encoder_kernel(%arg0: memref<32x32xf32, #tpu.memory_space<vmem>>, %arg1: memref<2x32x96xbf16, #tpu.memory_space<vmem>>, %arg2: memref<2x1x96xf32, #tpu.memory_space<vmem>>, %arg3: memref<2x32x32xbf16, #tpu.memory_space<vmem>>, %arg4: memref<2x1x32xf32, #tpu.memory_space<vmem>>, %arg5: memref<2x1x32xf32, #tpu.memory_space<vmem>>, %arg6: memref<2x1x32xf32, #tpu.memory_space<vmem>>, %arg7: memref<2x32x64xbf16, #tpu.memory_space<vmem>>, %arg8: memref<2x1x64xf32, #tpu.memory_space<vmem>>, %arg9: memref<2x64x32xbf16, #tpu.memory_space<vmem>>, %arg10: memref<2x1x32xf32, #tpu.memory_space<vmem>>, %arg11: memref<2x1x32xf32, #tpu.memory_space<vmem>>, %arg12: memref<2x1x32xf32, #tpu.memory_space<vmem>>, %arg13: memref<32x128xf32, #tpu.memory_space<vmem>>, %arg14: memref<128x32xf32, #tpu.memory_space<vmem>>, %arg15: memref<128x128xf32, #tpu.memory_space<vmem>>, %arg16: memref<1x32xf32, #tpu.memory_space<vmem>>, %arg17: memref<32x32xf32, #tpu.memory_space<vmem>>) attributes {dimension_semantics = [], scalar_prefetch = 0 : i64, scratch_operands = 0 : i64, tpu.core_type = #tpu.core_type<tc>} {
    %c0 = arith.constant 0 : index
    %c0_0 = arith.constant 0 : index
    %0 = vector.load %arg0[%c0, %c0_0] : memref<32x32xf32, #tpu.memory_space<vmem>>, vector<32x32xf32>
    %c0_1 = arith.constant 0 : index
    %c0_2 = arith.constant 0 : index
    %1 = vector.load %arg13[%c0_1, %c0_2] : memref<32x128xf32, #tpu.memory_space<vmem>>, vector<32x128xf32>
    %c0_3 = arith.constant 0 : index
    %c0_4 = arith.constant 0 : index
    %2 = vector.load %arg14[%c0_3, %c0_4] : memref<128x32xf32, #tpu.memory_space<vmem>>, vector<128x32xf32>
    %c0_5 = arith.constant 0 : index
    %c0_6 = arith.constant 0 : index
    %3 = vector.load %arg15[%c0_5, %c0_6] : memref<128x128xf32, #tpu.memory_space<vmem>>, vector<128x128xf32>
    %c0_7 = arith.constant 0 : index
    %c0_8 = arith.constant 0 : index
    %4 = vector.load %arg16[%c0_7, %c0_8] : memref<1x32xf32, #tpu.memory_space<vmem>>, vector<1x32xf32>
    %5 = arith.truncf %0 : vector<32x32xf32> to vector<32x32xbf16>
    %c0_9 = arith.constant 0 : index
    %c0_10 = arith.constant 0 : index
    %c0_11 = arith.constant 0 : index
    %6 = vector.load %arg1[%c0_9, %c0_10, %c0_11] : memref<2x32x96xbf16, #tpu.memory_space<vmem>>, vector<1x32x96xbf16>
    %7 = vector.shape_cast %6 : vector<1x32x96xbf16> to vector<32x96xbf16>
    %cst = arith.constant dense<0.000000e+00> : vector<32x96xf32>
    %8 = tpu.matmul %5, %7, %cst {dimension_numbers = #tpu.dot_dimension_numbers<[1], [0], [0], [1], [0, 0, 1, 1], [], []>} : vector<32x32xbf16>, vector<32x96xbf16>, vector<32x96xf32> -> vector<32x96xf32>
    %c0_12 = arith.constant 0 : index
    %c0_13 = arith.constant 0 : index
    %c0_14 = arith.constant 0 : index
    %9 = vector.load %arg2[%c0_12, %c0_13, %c0_14] : memref<2x1x96xf32, #tpu.memory_space<vmem>>, vector<1x1x96xf32>
    %10 = vector.shape_cast %9 : vector<1x1x96xf32> to vector<1x96xf32>
    %11 = vector.broadcast %10 : vector<1x96xf32> to vector<32x96xf32>
    %12 = arith.addf %8, %11 : vector<32x96xf32>
    %13 = vector.extract_strided_slice %12 {offsets = [0, 0], sizes = [32, 32], strides = [1, 1]} : vector<32x96xf32> to vector<32x32xf32>
    %14 = vector.extract_strided_slice %12 {offsets = [0, 32], sizes = [32, 32], strides = [1, 1]} : vector<32x96xf32> to vector<32x32xf32>
    %15 = vector.extract_strided_slice %12 {offsets = [0, 64], sizes = [32, 32], strides = [1, 1]} : vector<32x96xf32> to vector<32x32xf32>
    %16 = tpu.concatenate %14, %14, %14, %14 in 0 : vector<32x32xf32>, vector<32x32xf32>, vector<32x32xf32>, vector<32x32xf32> -> vector<128x32xf32>
    %17 = arith.mulf %16, %2 : vector<128x32xf32>
    %18 = tpu.concatenate %15, %15, %15, %15 in 0 : vector<32x32xf32>, vector<32x32xf32>, vector<32x32xf32>, vector<32x32xf32> -> vector<128x32xf32>
    %19 = arith.mulf %18, %2 : vector<128x32xf32>
    %20 = arith.truncf %13 : vector<32x32xf32> to vector<32x32xbf16>
    %21 = arith.truncf %17 : vector<128x32xf32> to vector<128x32xbf16>
    "tpu.trace_start"() <{level = 10 : i32, message = "td,kd->tk"}> : () -> ()
    %cst_15 = arith.constant dense<0.000000e+00> : vector<32x128xf32>
    %22 = tpu.matmul %20, %21, %cst_15 {dimension_numbers = #tpu.dot_dimension_numbers<[1], [1], [0], [0], [0, 0, 1, 0], [], []>} : vector<32x32xbf16>, vector<128x32xbf16>, vector<32x128xf32> -> vector<32x128xf32>
    "tpu.trace_stop"() : () -> ()
    %23 = arith.addf %22, %1 : vector<32x128xf32>
    %cst_16 = arith.constant dense<0xFF800000> : vector<32xf32>
    %24 = vector.multi_reduction <maximumf>, %23, %cst_16 [1] : vector<32x128xf32> to vector<32xf32>
    %25 = vector.shape_cast %24 : vector<32xf32> to vector<32x1xf32>
    %26 = vector.broadcast %25 : vector<32x1xf32> to vector<32x128xf32>
    %27 = arith.subf %23, %26 : vector<32x128xf32>
    %28 = math.exp %27 : vector<32x128xf32>
    %cst_17 = arith.constant dense<0.000000e+00> : vector<32x128xf32>
    %29 = tpu.matmul %28, %3, %cst_17 {dimension_numbers = #tpu.dot_dimension_numbers<[1], [0], [0], [1], [0, 0, 1, 1], [], []>} : vector<32x128xf32>, vector<128x128xf32>, vector<32x128xf32> -> vector<32x128xf32>
    %30 = tpu.reciprocal %29 {approx = true} : vector<32x128xf32> -> vector<32x128xf32>
    %31 = arith.mulf %28, %30 : vector<32x128xf32>
    %32 = arith.truncf %31 : vector<32x128xf32> to vector<32x128xbf16>
    %33 = arith.truncf %19 : vector<128x32xf32> to vector<128x32xbf16>
    %cst_18 = arith.constant dense<0.000000e+00> : vector<32x32xf32>
    %34 = tpu.matmul %32, %33, %cst_18 {dimension_numbers = #tpu.dot_dimension_numbers<[1], [0], [0], [1], [0, 0, 1, 1], [], []>} : vector<32x128xbf16>, vector<128x32xbf16>, vector<32x32xf32> -> vector<32x32xf32>
    %35 = arith.truncf %34 : vector<32x32xf32> to vector<32x32xbf16>
    %c0_19 = arith.constant 0 : index
    %c0_20 = arith.constant 0 : index
    %c0_21 = arith.constant 0 : index
    %36 = vector.load %arg3[%c0_19, %c0_20, %c0_21] : memref<2x32x32xbf16, #tpu.memory_space<vmem>>, vector<1x32x32xbf16>
    %37 = vector.shape_cast %36 : vector<1x32x32xbf16> to vector<32x32xbf16>
    %cst_22 = arith.constant dense<0.000000e+00> : vector<32x32xf32>
    %38 = tpu.matmul %35, %37, %cst_22 {dimension_numbers = #tpu.dot_dimension_numbers<[1], [0], [0], [1], [0, 0, 1, 1], [], []>} : vector<32x32xbf16>, vector<32x32xbf16>, vector<32x32xf32> -> vector<32x32xf32>
    %c0_23 = arith.constant 0 : index
    %c0_24 = arith.constant 0 : index
    %c0_25 = arith.constant 0 : index
    %39 = vector.load %arg4[%c0_23, %c0_24, %c0_25] : memref<2x1x32xf32, #tpu.memory_space<vmem>>, vector<1x1x32xf32>
    %40 = vector.shape_cast %39 : vector<1x1x32xf32> to vector<1x32xf32>
    %41 = vector.broadcast %40 : vector<1x32xf32> to vector<32x32xf32>
    %42 = arith.addf %38, %41 : vector<32x32xf32>
    %43 = arith.addf %0, %42 : vector<32x32xf32>
    %c0_26 = arith.constant 0 : index
    %c0_27 = arith.constant 0 : index
    %c0_28 = arith.constant 0 : index
    %44 = vector.load %arg5[%c0_26, %c0_27, %c0_28] : memref<2x1x32xf32, #tpu.memory_space<vmem>>, vector<1x1x32xf32>
    %45 = vector.shape_cast %44 : vector<1x1x32xf32> to vector<1x32xf32>
    %c0_29 = arith.constant 0 : index
    %c0_30 = arith.constant 0 : index
    %c0_31 = arith.constant 0 : index
    %46 = vector.load %arg6[%c0_29, %c0_30, %c0_31] : memref<2x1x32xf32, #tpu.memory_space<vmem>>, vector<1x1x32xf32>
    %47 = vector.shape_cast %46 : vector<1x1x32xf32> to vector<1x32xf32>
    %48 = arith.mulf %43, %43 : vector<32x32xf32>
    %49 = tpu.concatenate %43, %48 in 1 : vector<32x32xf32>, vector<32x32xf32> -> vector<32x64xf32>
    %cst_32 = arith.constant dense<0.000000e+00> : vector<1x64xf32>
    %50 = tpu.matmul %4, %49, %cst_32 {dimension_numbers = #tpu.dot_dimension_numbers<[1], [0], [0], [1], [0, 0, 1, 1], [], []>} : vector<1x32xf32>, vector<32x64xf32>, vector<1x64xf32> -> vector<1x64xf32>
    %51 = vector.extract_strided_slice %50 {offsets = [0, 0], sizes = [1, 32], strides = [1, 1]} : vector<1x64xf32> to vector<1x32xf32>
    %cst_33 = arith.constant 3.125000e-02 : f32
    %52 = vector.broadcast %cst_33 : f32 to vector<1x32xf32>
    %53 = arith.mulf %51, %52 : vector<1x32xf32>
    %54 = vector.extract_strided_slice %50 {offsets = [0, 32], sizes = [1, 32], strides = [1, 1]} : vector<1x64xf32> to vector<1x32xf32>
    %cst_34 = arith.constant 3.125000e-02 : f32
    %55 = vector.broadcast %cst_34 : f32 to vector<1x32xf32>
    %56 = arith.mulf %54, %55 : vector<1x32xf32>
    %57 = arith.mulf %53, %53 : vector<1x32xf32>
    %58 = arith.subf %56, %57 : vector<1x32xf32>
    %cst_35 = arith.constant 9.99999974E-6 : f32
    %59 = vector.broadcast %cst_35 : f32 to vector<1x32xf32>
    %60 = arith.addf %58, %59 : vector<1x32xf32>
    %61 = math.rsqrt %60 : vector<1x32xf32>
    %62 = arith.mulf %45, %61 : vector<1x32xf32>
    %63 = vector.broadcast %62 : vector<1x32xf32> to vector<32x32xf32>
    %64 = arith.mulf %43, %63 : vector<32x32xf32>
    %65 = arith.mulf %53, %62 : vector<1x32xf32>
    %66 = arith.subf %47, %65 : vector<1x32xf32>
    %67 = vector.broadcast %66 : vector<1x32xf32> to vector<32x32xf32>
    %68 = arith.addf %64, %67 : vector<32x32xf32>
    %69 = arith.truncf %68 : vector<32x32xf32> to vector<32x32xbf16>
    %c0_36 = arith.constant 0 : index
    %c0_37 = arith.constant 0 : index
    %c0_38 = arith.constant 0 : index
    %70 = vector.load %arg7[%c0_36, %c0_37, %c0_38] : memref<2x32x64xbf16, #tpu.memory_space<vmem>>, vector<1x32x64xbf16>
    %71 = vector.shape_cast %70 : vector<1x32x64xbf16> to vector<32x64xbf16>
    %cst_39 = arith.constant dense<0.000000e+00> : vector<32x64xf32>
    %72 = tpu.matmul %69, %71, %cst_39 {dimension_numbers = #tpu.dot_dimension_numbers<[1], [0], [0], [1], [0, 0, 1, 1], [], []>} : vector<32x32xbf16>, vector<32x64xbf16>, vector<32x64xf32> -> vector<32x64xf32>
    %c0_40 = arith.constant 0 : index
    %c0_41 = arith.constant 0 : index
    %c0_42 = arith.constant 0 : index
    %73 = vector.load %arg8[%c0_40, %c0_41, %c0_42] : memref<2x1x64xf32, #tpu.memory_space<vmem>>, vector<1x1x64xf32>
    %74 = vector.shape_cast %73 : vector<1x1x64xf32> to vector<1x64xf32>
    %75 = vector.broadcast %74 : vector<1x64xf32> to vector<32x64xf32>
    %76 = arith.addf %72, %75 : vector<32x64xf32>
    %cst_43 = arith.constant 5.000000e-01 : f32
    %77 = vector.broadcast %cst_43 : f32 to vector<32x64xf32>
    %78 = arith.mulf %77, %76 : vector<32x64xf32>
    %cst_44 = arith.constant 0.707106769 : f32
    %79 = vector.broadcast %cst_44 : f32 to vector<32x64xf32>
    %80 = arith.mulf %76, %79 : vector<32x64xf32>
    %cst_45 = arith.constant 0.000000e+00 : f32
    %81 = vector.broadcast %cst_45 : f32 to vector<32x64xf32>
    %82 = arith.cmpf oge, %80, %81 : vector<32x64xf32>
    %cst_46 = arith.constant 1.000000e+00 : f32
    %cst_47 = arith.constant -1.000000e+00 : f32
    %83 = vector.broadcast %cst_46 : f32 to vector<32x64xf32>
    %84 = vector.broadcast %cst_47 : f32 to vector<32x64xf32>
    %85 = arith.select %82, %83, %84 : vector<32x64xi1>, vector<32x64xf32>
    %86 = math.absf %80 : vector<32x64xf32>
    %cst_48 = arith.constant 0.327591091 : f32
    %87 = vector.broadcast %cst_48 : f32 to vector<32x64xf32>
    %88 = arith.mulf %87, %86 : vector<32x64xf32>
    %cst_49 = arith.constant 1.000000e+00 : f32
    %89 = vector.broadcast %cst_49 : f32 to vector<32x64xf32>
    %90 = arith.addf %89, %88 : vector<32x64xf32>
    %cst_50 = arith.constant 1.000000e+00 : f32
    %91 = vector.broadcast %cst_50 : f32 to vector<32x64xf32>
    %92 = arith.divf %91, %90 : vector<32x64xf32>
    %cst_51 = arith.constant 1.06140542 : f32
    %93 = vector.broadcast %cst_51 : f32 to vector<32x64xf32>
    %94 = arith.mulf %93, %92 : vector<32x64xf32>
    %cst_52 = arith.constant -1.45315206 : f32
    %95 = vector.broadcast %cst_52 : f32 to vector<32x64xf32>
    %96 = arith.addf %94, %95 : vector<32x64xf32>
    %97 = arith.mulf %96, %92 : vector<32x64xf32>
    %cst_53 = arith.constant 1.42141378 : f32
    %98 = vector.broadcast %cst_53 : f32 to vector<32x64xf32>
    %99 = arith.addf %97, %98 : vector<32x64xf32>
    %100 = arith.mulf %99, %92 : vector<32x64xf32>
    %cst_54 = arith.constant -0.284496725 : f32
    %101 = vector.broadcast %cst_54 : f32 to vector<32x64xf32>
    %102 = arith.addf %100, %101 : vector<32x64xf32>
    %103 = arith.mulf %102, %92 : vector<32x64xf32>
    %cst_55 = arith.constant 0.254829586 : f32
    %104 = vector.broadcast %cst_55 : f32 to vector<32x64xf32>
    %105 = arith.addf %103, %104 : vector<32x64xf32>
    %106 = arith.mulf %105, %92 : vector<32x64xf32>
    %cst_56 = arith.constant 0.000000e+00 : f32
    %107 = vector.broadcast %cst_56 : f32 to vector<32x64xf32>
    %108 = arith.subf %107, %86 : vector<32x64xf32>
    %109 = arith.mulf %108, %86 : vector<32x64xf32>
    %110 = math.exp %109 : vector<32x64xf32>
    %111 = arith.mulf %106, %110 : vector<32x64xf32>
    %cst_57 = arith.constant 1.000000e+00 : f32
    %112 = vector.broadcast %cst_57 : f32 to vector<32x64xf32>
    %113 = arith.subf %112, %111 : vector<32x64xf32>
    %114 = arith.mulf %85, %113 : vector<32x64xf32>
    %cst_58 = arith.constant 1.000000e+00 : f32
    %115 = vector.broadcast %cst_58 : f32 to vector<32x64xf32>
    %116 = arith.addf %115, %114 : vector<32x64xf32>
    %117 = arith.mulf %78, %116 : vector<32x64xf32>
    %118 = arith.truncf %117 : vector<32x64xf32> to vector<32x64xbf16>
    %c0_59 = arith.constant 0 : index
    %c0_60 = arith.constant 0 : index
    %c0_61 = arith.constant 0 : index
    %119 = vector.load %arg9[%c0_59, %c0_60, %c0_61] : memref<2x64x32xbf16, #tpu.memory_space<vmem>>, vector<1x64x32xbf16>
    %120 = vector.shape_cast %119 : vector<1x64x32xbf16> to vector<64x32xbf16>
    %cst_62 = arith.constant dense<0.000000e+00> : vector<32x32xf32>
    %121 = tpu.matmul %118, %120, %cst_62 {dimension_numbers = #tpu.dot_dimension_numbers<[1], [0], [0], [1], [0, 0, 1, 1], [], []>} : vector<32x64xbf16>, vector<64x32xbf16>, vector<32x32xf32> -> vector<32x32xf32>
    %c0_63 = arith.constant 0 : index
    %c0_64 = arith.constant 0 : index
    %c0_65 = arith.constant 0 : index
    %122 = vector.load %arg10[%c0_63, %c0_64, %c0_65] : memref<2x1x32xf32, #tpu.memory_space<vmem>>, vector<1x1x32xf32>
    %123 = vector.shape_cast %122 : vector<1x1x32xf32> to vector<1x32xf32>
    %124 = vector.broadcast %123 : vector<1x32xf32> to vector<32x32xf32>
    %125 = arith.addf %121, %124 : vector<32x32xf32>
    %126 = arith.addf %68, %125 : vector<32x32xf32>
    %c0_66 = arith.constant 0 : index
    %c0_67 = arith.constant 0 : index
    %c0_68 = arith.constant 0 : index
    %127 = vector.load %arg11[%c0_66, %c0_67, %c0_68] : memref<2x1x32xf32, #tpu.memory_space<vmem>>, vector<1x1x32xf32>
    %128 = vector.shape_cast %127 : vector<1x1x32xf32> to vector<1x32xf32>
    %c0_69 = arith.constant 0 : index
    %c0_70 = arith.constant 0 : index
    %c0_71 = arith.constant 0 : index
    %129 = vector.load %arg12[%c0_69, %c0_70, %c0_71] : memref<2x1x32xf32, #tpu.memory_space<vmem>>, vector<1x1x32xf32>
    %130 = vector.shape_cast %129 : vector<1x1x32xf32> to vector<1x32xf32>
    %131 = arith.mulf %126, %126 : vector<32x32xf32>
    %132 = tpu.concatenate %126, %131 in 1 : vector<32x32xf32>, vector<32x32xf32> -> vector<32x64xf32>
    %cst_72 = arith.constant dense<0.000000e+00> : vector<1x64xf32>
    %133 = tpu.matmul %4, %132, %cst_72 {dimension_numbers = #tpu.dot_dimension_numbers<[1], [0], [0], [1], [0, 0, 1, 1], [], []>} : vector<1x32xf32>, vector<32x64xf32>, vector<1x64xf32> -> vector<1x64xf32>
    %134 = vector.extract_strided_slice %133 {offsets = [0, 0], sizes = [1, 32], strides = [1, 1]} : vector<1x64xf32> to vector<1x32xf32>
    %cst_73 = arith.constant 3.125000e-02 : f32
    %135 = vector.broadcast %cst_73 : f32 to vector<1x32xf32>
    %136 = arith.mulf %134, %135 : vector<1x32xf32>
    %137 = vector.extract_strided_slice %133 {offsets = [0, 32], sizes = [1, 32], strides = [1, 1]} : vector<1x64xf32> to vector<1x32xf32>
    %cst_74 = arith.constant 3.125000e-02 : f32
    %138 = vector.broadcast %cst_74 : f32 to vector<1x32xf32>
    %139 = arith.mulf %137, %138 : vector<1x32xf32>
    %140 = arith.mulf %136, %136 : vector<1x32xf32>
    %141 = arith.subf %139, %140 : vector<1x32xf32>
    %cst_75 = arith.constant 9.99999974E-6 : f32
    %142 = vector.broadcast %cst_75 : f32 to vector<1x32xf32>
    %143 = arith.addf %141, %142 : vector<1x32xf32>
    %144 = math.rsqrt %143 : vector<1x32xf32>
    %145 = arith.mulf %128, %144 : vector<1x32xf32>
    %146 = vector.broadcast %145 : vector<1x32xf32> to vector<32x32xf32>
    %147 = arith.mulf %126, %146 : vector<32x32xf32>
    %148 = arith.mulf %136, %145 : vector<1x32xf32>
    %149 = arith.subf %130, %148 : vector<1x32xf32>
    %150 = vector.broadcast %149 : vector<1x32xf32> to vector<32x32xf32>
    %151 = arith.addf %147, %150 : vector<32x32xf32>
    %152 = arith.truncf %151 : vector<32x32xf32> to vector<32x32xbf16>
    %c1 = arith.constant 1 : index
    %c0_76 = arith.constant 0 : index
    %c0_77 = arith.constant 0 : index
    %153 = vector.load %arg1[%c1, %c0_76, %c0_77] : memref<2x32x96xbf16, #tpu.memory_space<vmem>>, vector<1x32x96xbf16>
    %154 = vector.shape_cast %153 : vector<1x32x96xbf16> to vector<32x96xbf16>
    %cst_78 = arith.constant dense<0.000000e+00> : vector<32x96xf32>
    %155 = tpu.matmul %152, %154, %cst_78 {dimension_numbers = #tpu.dot_dimension_numbers<[1], [0], [0], [1], [0, 0, 1, 1], [], []>} : vector<32x32xbf16>, vector<32x96xbf16>, vector<32x96xf32> -> vector<32x96xf32>
    %c1_79 = arith.constant 1 : index
    %c0_80 = arith.constant 0 : index
    %c0_81 = arith.constant 0 : index
    %156 = vector.load %arg2[%c1_79, %c0_80, %c0_81] : memref<2x1x96xf32, #tpu.memory_space<vmem>>, vector<1x1x96xf32>
    %157 = vector.shape_cast %156 : vector<1x1x96xf32> to vector<1x96xf32>
    %158 = vector.broadcast %157 : vector<1x96xf32> to vector<32x96xf32>
    %159 = arith.addf %155, %158 : vector<32x96xf32>
    %160 = vector.extract_strided_slice %159 {offsets = [0, 0], sizes = [32, 32], strides = [1, 1]} : vector<32x96xf32> to vector<32x32xf32>
    %161 = vector.extract_strided_slice %159 {offsets = [0, 32], sizes = [32, 32], strides = [1, 1]} : vector<32x96xf32> to vector<32x32xf32>
    %162 = vector.extract_strided_slice %159 {offsets = [0, 64], sizes = [32, 32], strides = [1, 1]} : vector<32x96xf32> to vector<32x32xf32>
    %163 = tpu.concatenate %161, %161, %161, %161 in 0 : vector<32x32xf32>, vector<32x32xf32>, vector<32x32xf32>, vector<32x32xf32> -> vector<128x32xf32>
    %164 = arith.mulf %163, %2 : vector<128x32xf32>
    %165 = tpu.concatenate %162, %162, %162, %162 in 0 : vector<32x32xf32>, vector<32x32xf32>, vector<32x32xf32>, vector<32x32xf32> -> vector<128x32xf32>
    %166 = arith.mulf %165, %2 : vector<128x32xf32>
    %167 = arith.truncf %160 : vector<32x32xf32> to vector<32x32xbf16>
    %168 = arith.truncf %164 : vector<128x32xf32> to vector<128x32xbf16>
    "tpu.trace_start"() <{level = 10 : i32, message = "td,kd->tk"}> : () -> ()
    %cst_82 = arith.constant dense<0.000000e+00> : vector<32x128xf32>
    %169 = tpu.matmul %167, %168, %cst_82 {dimension_numbers = #tpu.dot_dimension_numbers<[1], [1], [0], [0], [0, 0, 1, 0], [], []>} : vector<32x32xbf16>, vector<128x32xbf16>, vector<32x128xf32> -> vector<32x128xf32>
    "tpu.trace_stop"() : () -> ()
    %170 = arith.addf %169, %1 : vector<32x128xf32>
    %cst_83 = arith.constant dense<0xFF800000> : vector<32xf32>
    %171 = vector.multi_reduction <maximumf>, %170, %cst_83 [1] : vector<32x128xf32> to vector<32xf32>
    %172 = vector.shape_cast %171 : vector<32xf32> to vector<32x1xf32>
    %173 = vector.broadcast %172 : vector<32x1xf32> to vector<32x128xf32>
    %174 = arith.subf %170, %173 : vector<32x128xf32>
    %175 = math.exp %174 : vector<32x128xf32>
    %cst_84 = arith.constant dense<0.000000e+00> : vector<32x128xf32>
    %176 = tpu.matmul %175, %3, %cst_84 {dimension_numbers = #tpu.dot_dimension_numbers<[1], [0], [0], [1], [0, 0, 1, 1], [], []>} : vector<32x128xf32>, vector<128x128xf32>, vector<32x128xf32> -> vector<32x128xf32>
    %177 = tpu.reciprocal %176 {approx = true} : vector<32x128xf32> -> vector<32x128xf32>
    %178 = arith.mulf %175, %177 : vector<32x128xf32>
    %179 = arith.truncf %178 : vector<32x128xf32> to vector<32x128xbf16>
    %180 = arith.truncf %166 : vector<128x32xf32> to vector<128x32xbf16>
    %cst_85 = arith.constant dense<0.000000e+00> : vector<32x32xf32>
    %181 = tpu.matmul %179, %180, %cst_85 {dimension_numbers = #tpu.dot_dimension_numbers<[1], [0], [0], [1], [0, 0, 1, 1], [], []>} : vector<32x128xbf16>, vector<128x32xbf16>, vector<32x32xf32> -> vector<32x32xf32>
    %182 = arith.truncf %181 : vector<32x32xf32> to vector<32x32xbf16>
    %c1_86 = arith.constant 1 : index
    %c0_87 = arith.constant 0 : index
    %c0_88 = arith.constant 0 : index
    %183 = vector.load %arg3[%c1_86, %c0_87, %c0_88] : memref<2x32x32xbf16, #tpu.memory_space<vmem>>, vector<1x32x32xbf16>
    %184 = vector.shape_cast %183 : vector<1x32x32xbf16> to vector<32x32xbf16>
    %cst_89 = arith.constant dense<0.000000e+00> : vector<32x32xf32>
    %185 = tpu.matmul %182, %184, %cst_89 {dimension_numbers = #tpu.dot_dimension_numbers<[1], [0], [0], [1], [0, 0, 1, 1], [], []>} : vector<32x32xbf16>, vector<32x32xbf16>, vector<32x32xf32> -> vector<32x32xf32>
    %c1_90 = arith.constant 1 : index
    %c0_91 = arith.constant 0 : index
    %c0_92 = arith.constant 0 : index
    %186 = vector.load %arg4[%c1_90, %c0_91, %c0_92] : memref<2x1x32xf32, #tpu.memory_space<vmem>>, vector<1x1x32xf32>
    %187 = vector.shape_cast %186 : vector<1x1x32xf32> to vector<1x32xf32>
    %188 = vector.broadcast %187 : vector<1x32xf32> to vector<32x32xf32>
    %189 = arith.addf %185, %188 : vector<32x32xf32>
    %190 = arith.addf %151, %189 : vector<32x32xf32>
    %c1_93 = arith.constant 1 : index
    %c0_94 = arith.constant 0 : index
    %c0_95 = arith.constant 0 : index
    %191 = vector.load %arg5[%c1_93, %c0_94, %c0_95] : memref<2x1x32xf32, #tpu.memory_space<vmem>>, vector<1x1x32xf32>
    %192 = vector.shape_cast %191 : vector<1x1x32xf32> to vector<1x32xf32>
    %c1_96 = arith.constant 1 : index
    %c0_97 = arith.constant 0 : index
    %c0_98 = arith.constant 0 : index
    %193 = vector.load %arg6[%c1_96, %c0_97, %c0_98] : memref<2x1x32xf32, #tpu.memory_space<vmem>>, vector<1x1x32xf32>
    %194 = vector.shape_cast %193 : vector<1x1x32xf32> to vector<1x32xf32>
    %195 = arith.mulf %190, %190 : vector<32x32xf32>
    %196 = tpu.concatenate %190, %195 in 1 : vector<32x32xf32>, vector<32x32xf32> -> vector<32x64xf32>
    %cst_99 = arith.constant dense<0.000000e+00> : vector<1x64xf32>
    %197 = tpu.matmul %4, %196, %cst_99 {dimension_numbers = #tpu.dot_dimension_numbers<[1], [0], [0], [1], [0, 0, 1, 1], [], []>} : vector<1x32xf32>, vector<32x64xf32>, vector<1x64xf32> -> vector<1x64xf32>
    %198 = vector.extract_strided_slice %197 {offsets = [0, 0], sizes = [1, 32], strides = [1, 1]} : vector<1x64xf32> to vector<1x32xf32>
    %cst_100 = arith.constant 3.125000e-02 : f32
    %199 = vector.broadcast %cst_100 : f32 to vector<1x32xf32>
    %200 = arith.mulf %198, %199 : vector<1x32xf32>
    %201 = vector.extract_strided_slice %197 {offsets = [0, 32], sizes = [1, 32], strides = [1, 1]} : vector<1x64xf32> to vector<1x32xf32>
    %cst_101 = arith.constant 3.125000e-02 : f32
    %202 = vector.broadcast %cst_101 : f32 to vector<1x32xf32>
    %203 = arith.mulf %201, %202 : vector<1x32xf32>
    %204 = arith.mulf %200, %200 : vector<1x32xf32>
    %205 = arith.subf %203, %204 : vector<1x32xf32>
    %cst_102 = arith.constant 9.99999974E-6 : f32
    %206 = vector.broadcast %cst_102 : f32 to vector<1x32xf32>
    %207 = arith.addf %205, %206 : vector<1x32xf32>
    %208 = math.rsqrt %207 : vector<1x32xf32>
    %209 = arith.mulf %192, %208 : vector<1x32xf32>
    %210 = vector.broadcast %209 : vector<1x32xf32> to vector<32x32xf32>
    %211 = arith.mulf %190, %210 : vector<32x32xf32>
    %212 = arith.mulf %200, %209 : vector<1x32xf32>
    %213 = arith.subf %194, %212 : vector<1x32xf32>
    %214 = vector.broadcast %213 : vector<1x32xf32> to vector<32x32xf32>
    %215 = arith.addf %211, %214 : vector<32x32xf32>
    %216 = arith.truncf %215 : vector<32x32xf32> to vector<32x32xbf16>
    %c1_103 = arith.constant 1 : index
    %c0_104 = arith.constant 0 : index
    %c0_105 = arith.constant 0 : index
    %217 = vector.load %arg7[%c1_103, %c0_104, %c0_105] : memref<2x32x64xbf16, #tpu.memory_space<vmem>>, vector<1x32x64xbf16>
    %218 = vector.shape_cast %217 : vector<1x32x64xbf16> to vector<32x64xbf16>
    %cst_106 = arith.constant dense<0.000000e+00> : vector<32x64xf32>
    %219 = tpu.matmul %216, %218, %cst_106 {dimension_numbers = #tpu.dot_dimension_numbers<[1], [0], [0], [1], [0, 0, 1, 1], [], []>} : vector<32x32xbf16>, vector<32x64xbf16>, vector<32x64xf32> -> vector<32x64xf32>
    %c1_107 = arith.constant 1 : index
    %c0_108 = arith.constant 0 : index
    %c0_109 = arith.constant 0 : index
    %220 = vector.load %arg8[%c1_107, %c0_108, %c0_109] : memref<2x1x64xf32, #tpu.memory_space<vmem>>, vector<1x1x64xf32>
    %221 = vector.shape_cast %220 : vector<1x1x64xf32> to vector<1x64xf32>
    %222 = vector.broadcast %221 : vector<1x64xf32> to vector<32x64xf32>
    %223 = arith.addf %219, %222 : vector<32x64xf32>
    %cst_110 = arith.constant 5.000000e-01 : f32
    %224 = vector.broadcast %cst_110 : f32 to vector<32x64xf32>
    %225 = arith.mulf %224, %223 : vector<32x64xf32>
    %cst_111 = arith.constant 0.707106769 : f32
    %226 = vector.broadcast %cst_111 : f32 to vector<32x64xf32>
    %227 = arith.mulf %223, %226 : vector<32x64xf32>
    %cst_112 = arith.constant 0.000000e+00 : f32
    %228 = vector.broadcast %cst_112 : f32 to vector<32x64xf32>
    %229 = arith.cmpf oge, %227, %228 : vector<32x64xf32>
    %cst_113 = arith.constant 1.000000e+00 : f32
    %cst_114 = arith.constant -1.000000e+00 : f32
    %230 = vector.broadcast %cst_113 : f32 to vector<32x64xf32>
    %231 = vector.broadcast %cst_114 : f32 to vector<32x64xf32>
    %232 = arith.select %229, %230, %231 : vector<32x64xi1>, vector<32x64xf32>
    %233 = math.absf %227 : vector<32x64xf32>
    %cst_115 = arith.constant 0.327591091 : f32
    %234 = vector.broadcast %cst_115 : f32 to vector<32x64xf32>
    %235 = arith.mulf %234, %233 : vector<32x64xf32>
    %cst_116 = arith.constant 1.000000e+00 : f32
    %236 = vector.broadcast %cst_116 : f32 to vector<32x64xf32>
    %237 = arith.addf %236, %235 : vector<32x64xf32>
    %cst_117 = arith.constant 1.000000e+00 : f32
    %238 = vector.broadcast %cst_117 : f32 to vector<32x64xf32>
    %239 = arith.divf %238, %237 : vector<32x64xf32>
    %cst_118 = arith.constant 1.06140542 : f32
    %240 = vector.broadcast %cst_118 : f32 to vector<32x64xf32>
    %241 = arith.mulf %240, %239 : vector<32x64xf32>
    %cst_119 = arith.constant -1.45315206 : f32
    %242 = vector.broadcast %cst_119 : f32 to vector<32x64xf32>
    %243 = arith.addf %241, %242 : vector<32x64xf32>
    %244 = arith.mulf %243, %239 : vector<32x64xf32>
    %cst_120 = arith.constant 1.42141378 : f32
    %245 = vector.broadcast %cst_120 : f32 to vector<32x64xf32>
    %246 = arith.addf %244, %245 : vector<32x64xf32>
    %247 = arith.mulf %246, %239 : vector<32x64xf32>
    %cst_121 = arith.constant -0.284496725 : f32
    %248 = vector.broadcast %cst_121 : f32 to vector<32x64xf32>
    %249 = arith.addf %247, %248 : vector<32x64xf32>
    %250 = arith.mulf %249, %239 : vector<32x64xf32>
    %cst_122 = arith.constant 0.254829586 : f32
    %251 = vector.broadcast %cst_122 : f32 to vector<32x64xf32>
    %252 = arith.addf %250, %251 : vector<32x64xf32>
    %253 = arith.mulf %252, %239 : vector<32x64xf32>
    %cst_123 = arith.constant 0.000000e+00 : f32
    %254 = vector.broadcast %cst_123 : f32 to vector<32x64xf32>
    %255 = arith.subf %254, %233 : vector<32x64xf32>
    %256 = arith.mulf %255, %233 : vector<32x64xf32>
    %257 = math.exp %256 : vector<32x64xf32>
    %258 = arith.mulf %253, %257 : vector<32x64xf32>
    %cst_124 = arith.constant 1.000000e+00 : f32
    %259 = vector.broadcast %cst_124 : f32 to vector<32x64xf32>
    %260 = arith.subf %259, %258 : vector<32x64xf32>
    %261 = arith.mulf %232, %260 : vector<32x64xf32>
    %cst_125 = arith.constant 1.000000e+00 : f32
    %262 = vector.broadcast %cst_125 : f32 to vector<32x64xf32>
    %263 = arith.addf %262, %261 : vector<32x64xf32>
    %264 = arith.mulf %225, %263 : vector<32x64xf32>
    %265 = arith.truncf %264 : vector<32x64xf32> to vector<32x64xbf16>
    %c1_126 = arith.constant 1 : index
    %c0_127 = arith.constant 0 : index
    %c0_128 = arith.constant 0 : index
    %266 = vector.load %arg9[%c1_126, %c0_127, %c0_128] : memref<2x64x32xbf16, #tpu.memory_space<vmem>>, vector<1x64x32xbf16>
    %267 = vector.shape_cast %266 : vector<1x64x32xbf16> to vector<64x32xbf16>
    %cst_129 = arith.constant dense<0.000000e+00> : vector<32x32xf32>
    %268 = tpu.matmul %265, %267, %cst_129 {dimension_numbers = #tpu.dot_dimension_numbers<[1], [0], [0], [1], [0, 0, 1, 1], [], []>} : vector<32x64xbf16>, vector<64x32xbf16>, vector<32x32xf32> -> vector<32x32xf32>
    %c1_130 = arith.constant 1 : index
    %c0_131 = arith.constant 0 : index
    %c0_132 = arith.constant 0 : index
    %269 = vector.load %arg10[%c1_130, %c0_131, %c0_132] : memref<2x1x32xf32, #tpu.memory_space<vmem>>, vector<1x1x32xf32>
    %270 = vector.shape_cast %269 : vector<1x1x32xf32> to vector<1x32xf32>
    %271 = vector.broadcast %270 : vector<1x32xf32> to vector<32x32xf32>
    %272 = arith.addf %268, %271 : vector<32x32xf32>
    %273 = arith.addf %215, %272 : vector<32x32xf32>
    %c1_133 = arith.constant 1 : index
    %c0_134 = arith.constant 0 : index
    %c0_135 = arith.constant 0 : index
    %274 = vector.load %arg11[%c1_133, %c0_134, %c0_135] : memref<2x1x32xf32, #tpu.memory_space<vmem>>, vector<1x1x32xf32>
    %275 = vector.shape_cast %274 : vector<1x1x32xf32> to vector<1x32xf32>
    %c1_136 = arith.constant 1 : index
    %c0_137 = arith.constant 0 : index
    %c0_138 = arith.constant 0 : index
    %276 = vector.load %arg12[%c1_136, %c0_137, %c0_138] : memref<2x1x32xf32, #tpu.memory_space<vmem>>, vector<1x1x32xf32>
    %277 = vector.shape_cast %276 : vector<1x1x32xf32> to vector<1x32xf32>
    %278 = arith.mulf %273, %273 : vector<32x32xf32>
    %279 = tpu.concatenate %273, %278 in 1 : vector<32x32xf32>, vector<32x32xf32> -> vector<32x64xf32>
    %cst_139 = arith.constant dense<0.000000e+00> : vector<1x64xf32>
    %280 = tpu.matmul %4, %279, %cst_139 {dimension_numbers = #tpu.dot_dimension_numbers<[1], [0], [0], [1], [0, 0, 1, 1], [], []>} : vector<1x32xf32>, vector<32x64xf32>, vector<1x64xf32> -> vector<1x64xf32>
    %281 = vector.extract_strided_slice %280 {offsets = [0, 0], sizes = [1, 32], strides = [1, 1]} : vector<1x64xf32> to vector<1x32xf32>
    %cst_140 = arith.constant 3.125000e-02 : f32
    %282 = vector.broadcast %cst_140 : f32 to vector<1x32xf32>
    %283 = arith.mulf %281, %282 : vector<1x32xf32>
    %284 = vector.extract_strided_slice %280 {offsets = [0, 32], sizes = [1, 32], strides = [1, 1]} : vector<1x64xf32> to vector<1x32xf32>
    %cst_141 = arith.constant 3.125000e-02 : f32
    %285 = vector.broadcast %cst_141 : f32 to vector<1x32xf32>
    %286 = arith.mulf %284, %285 : vector<1x32xf32>
    %287 = arith.mulf %283, %283 : vector<1x32xf32>
    %288 = arith.subf %286, %287 : vector<1x32xf32>
    %cst_142 = arith.constant 9.99999974E-6 : f32
    %289 = vector.broadcast %cst_142 : f32 to vector<1x32xf32>
    %290 = arith.addf %288, %289 : vector<1x32xf32>
    %291 = math.rsqrt %290 : vector<1x32xf32>
    %292 = arith.mulf %275, %291 : vector<1x32xf32>
    %293 = vector.broadcast %292 : vector<1x32xf32> to vector<32x32xf32>
    %294 = arith.mulf %273, %293 : vector<32x32xf32>
    %295 = arith.mulf %283, %292 : vector<1x32xf32>
    %296 = arith.subf %277, %295 : vector<1x32xf32>
    %297 = vector.broadcast %296 : vector<1x32xf32> to vector<32x32xf32>
    %298 = arith.addf %294, %297 : vector<32x32xf32>
    %c0_143 = arith.constant 0 : index
    %c0_144 = arith.constant 0 : index
    %299 = vector.load %arg17[%c0_143, %c0_144] : memref<32x32xf32, #tpu.memory_space<vmem>>, vector<32x32xf32>
    tpu.vector_store %arg17[%c0_143, %c0_144], %298 {strides = array<i32>} : memref<32x32xf32, #tpu.memory_space<vmem>>, vector<32x32xf32>,
    return
  }
}

</mosaic_0001>

<llo_original>
// kernel: tst_encoder_pallas.1
$region0: #{tst_encoder_pallas.1}
  #allocation0 [shape = 'u32[]', space=smem, size = 0x4, offset = 0x4, fixed_abs, tag = 'smem constant byte address 0x4 - core index']
  #allocation1 [shape = 'u32[144,128]{1,0:T(1,128)}', space=vmem, size = 0x12000, scoped, tag = 'internal scratch']
  %s0 = inlined_call_operand.vmem [shape: f32[32,32], index: 0, kind: input, shape index: {}, may-alias: {0,17}]
  %s1 = inlined_call_operand.vmem [shape: bf16[2,32,96], index: 1, kind: input, shape index: {}]
  %s2 = inlined_call_operand.vmem [shape: f32[2,1,96], index: 2, kind: input, shape index: {}]
  %s3 = inlined_call_operand.vmem [shape: bf16[2,32,32], index: 3, kind: input, shape index: {}]
  %s4 = inlined_call_operand.hbm [shape: f32[2,1,32], index: 4, kind: input, shape index: {}]
  %s5 = inlined_call_operand.hbm [shape: f32[2,1,32], index: 5, kind: input, shape index: {}]
  %s6 = inlined_call_operand.hbm [shape: f32[2,1,32], index: 6, kind: input, shape index: {}]
  %s7 = inlined_call_operand.vmem [shape: bf16[2,32,64], index: 7, kind: input, shape index: {}]
  %s8 = inlined_call_operand.hbm [shape: f32[2,1,64], index: 8, kind: input, shape index: {}]
  %s9 = inlined_call_operand.vmem [shape: bf16[2,64,32], index: 9, kind: input, shape index: {}]
  %s10 = inlined_call_operand.vmem [shape: f32[2,1,32], index: 10, kind: input, shape index: {}]
  %s11 = inlined_call_operand.vmem [shape: f32[2,1,32], index: 11, kind: input, shape index: {}]
  %s12 = inlined_call_operand.vmem [shape: f32[2,1,32], index: 12, kind: input, shape index: {}]
  %s13 = inlined_call_operand.vmem [shape: f32[32,128], index: 13, kind: input, shape index: {}]
  %s14 = inlined_call_operand.vmem [shape: f32[128,32], index: 14, kind: input, shape index: {}]
  %s15 = inlined_call_operand.vmem [shape: f32[128,128], index: 15, kind: input, shape index: {}]
  %s16 = inlined_call_operand.vmem [shape: f32[1,32], index: 16, kind: input, shape index: {}]
  %s17 = inlined_call_operand.vmem [shape: f32[32,32], index: 17, kind: output, shape index: {}, may-alias: {0,17}]
  %s18 = sld [smem:[#allocation0]]
  $region94: #{tst_encoder_pallas.1} parent=0
    _
  %s20 = ssub.s32 1, %s18
  %s21 = scalar_select 0, %s20, %s18
  $region1: #{tst_encoder_pallas.1} parent=0
    #allocation2 [shape = 'u8[1024]{0}', space=vmem, size = 0x400, scoped, tag = 'input window, operand 4, single buffered']
    #allocation3 [shape = 's32[1]{0}', space=sflag, size = 0x4, scoped, tag = 'scoped memory for tst_encoder_pallas.1']
    #allocation4 [shape = 'u8[1024]{0}', space=vmem, size = 0x400, scoped, tag = 'input window, operand 5, single buffered']
    #allocation5 [shape = 's32[1]{0}', space=sflag, size = 0x4, scoped, tag = 'scoped memory for tst_encoder_pallas.1']
    #allocation6 [shape = 'u8[1024]{0}', space=vmem, size = 0x400, scoped, tag = 'input window, operand 6, single buffered']
    #allocation7 [shape = 'u8[1024]{0}', space=vmem, size = 0x400, scoped, tag = 'input window, operand 8, single buffered']
    #allocation8 [shape = 's32[1]{0}', space=sflag, size = 0x4, scoped, tag = 'scoped memory for tst_encoder_pallas.1']
    %22 = vsyncpa [#allocation3], 0
    %23 = vsyncpa [#allocation5], 0
    %24 = vsyncpa [#allocation8], 0
    // Predicated region
    $region2: #{tst_encoder_pallas.1} parent=1 // pred_check
      _
    $region3: #{tst_encoder_pallas.1} parent=1 // pred_check_branch
      %26 = sbr.rel (0) target = $region5
    $region4: #{tst_encoder_pallas.1} parent=1 // pred_region
      _
    $region5: #{tst_encoder_pallas.1} parent=1 // pred_fallthru
      _
    // Predicated region
    $region6: #{tst_encoder_pallas.1} parent=1 // pred_check
      _
    $region7: #{tst_encoder_pallas.1} parent=1 // pred_check_branch
      %28 = sbr.rel (0) target = $region9
    $region8: #{tst_encoder_pallas.1} parent=1 // pred_region
      _
    $region9: #{tst_encoder_pallas.1} parent=1 // pred_fallthru
      _
    // Predicated region
    $region10: #{tst_encoder_pallas.1} parent=1 // pred_check
      _
    $region11: #{tst_encoder_pallas.1} parent=1 // pred_check_branch
      %30 = sbr.rel (0) target = $region13
    $region12: #{tst_encoder_pallas.1} parent=1 // pred_region
      _
    $region13: #{tst_encoder_pallas.1} parent=1 // pred_fallthru
      _
    // Predicated region
    $region14: #{tst_encoder_pallas.1} parent=1 // pred_check
      _
    $region15: #{tst_encoder_pallas.1} parent=1 // pred_check_branch
      %32 = sbr.rel (0) target = $region17
    $region16: #{tst_encoder_pallas.1} parent=1 // pred_region
      _
    $region17: #{tst_encoder_pallas.1} parent=1 // pred_fallthru
      _
    // Predicated region
    $region18: #{tst_encoder_pallas.1} parent=1 // pred_check
      _
    $region19: #{tst_encoder_pallas.1} parent=1 // pred_check_branch
      %34 = sbr.rel (0) target = $region21
    $region20: #{tst_encoder_pallas.1} parent=1 // pred_region
      %s36 = ssub.s32 32, 32
      %37 = vsyncadd [#allocation3], %s36
      %s38 = sshll.u32 [#allocation2], 4
      %s39 = int_to_ptr.vmem [resolvable:$true] %s38
      %44 = dma.hbm_to_vmem [thread:$0]  %s4, 32, %s39, [#allocation3], 16, 16, 1
    $region21: #{tst_encoder_pallas.1} parent=1 // pred_fallthru
      _
    // Predicated region
    $region22: #{tst_encoder_pallas.1} parent=1 // pred_check
      _
    $region23: #{tst_encoder_pallas.1} parent=1 // pred_check_branch
      %46 = sbr.rel (0) target = $region25
    $region24: #{tst_encoder_pallas.1} parent=1 // pred_region
      %s48 = ssub.s32 32, 32
      %49 = vsyncadd [#allocation5], %s48
      %s50 = sshll.u32 [#allocation4], 4
      %s51 = int_to_ptr.vmem [resolvable:$true] %s50
      %56 = dma.hbm_to_vmem [thread:$0]  %s5, 32, %s51, [#allocation5], 16, 16, 1
    $region25: #{tst_encoder_pallas.1} parent=1 // pred_fallthru
      _
    // Predicated region
    $region26: #{tst_encoder_pallas.1} parent=1 // pred_check
      _
    $region27: #{tst_encoder_pallas.1} parent=1 // pred_check_branch
      %58 = sbr.rel (0) target = $region29
    $region28: #{tst_encoder_pallas.1} parent=1 // pred_region
      %s60 = ssub.s32 32, 32
      %61 = vsyncadd [#allocation5], %s60
      %s62 = sshll.u32 [#allocation6], 4
      %s63 = int_to_ptr.vmem [resolvable:$true] %s62
      %68 = dma.hbm_to_vmem [thread:$0]  %s6, 32, %s63, [#allocation5], 16, 16, 1
    $region29: #{tst_encoder_pallas.1} parent=1 // pred_fallthru
      _
    // Predicated region
    $region30: #{tst_encoder_pallas.1} parent=1 // pred_check
      _
    $region31: #{tst_encoder_pallas.1} parent=1 // pred_check_branch
      %70 = sbr.rel (0) target = $region33
    $region32: #{tst_encoder_pallas.1} parent=1 // pred_region
      _
    $region33: #{tst_encoder_pallas.1} parent=1 // pred_fallthru
      _
    // Predicated region
    $region34: #{tst_encoder_pallas.1} parent=1 // pred_check
      _
    $region35: #{tst_encoder_pallas.1} parent=1 // pred_check_branch
      %72 = sbr.rel (0) target = $region37
    $region36: #{tst_encoder_pallas.1} parent=1 // pred_region
      %s74 = ssub.s32 32, 32
      %75 = vsyncadd [#allocation8], %s74
      %s76 = sshll.u32 [#allocation7], 4
      %s77 = int_to_ptr.vmem [resolvable:$true] %s76
      %82 = dma.hbm_to_vmem [thread:$0]  %s8, 32, %s77, [#allocation8], 16, 16, 1
    $region37: #{tst_encoder_pallas.1} parent=1 // pred_fallthru
      _
    // Predicated region
    $region38: #{tst_encoder_pallas.1} parent=1 // pred_check
      _
    $region39: #{tst_encoder_pallas.1} parent=1 // pred_check_branch
      %84 = sbr.rel (0) target = $region41
    $region40: #{tst_encoder_pallas.1} parent=1 // pred_region
      _
    $region41: #{tst_encoder_pallas.1} parent=1 // pred_fallthru
      _
    // Predicated region
    $region42: #{tst_encoder_pallas.1} parent=1 // pred_check
      _
    $region43: #{tst_encoder_pallas.1} parent=1 // pred_check_branch
      %86 = sbr.rel (0) target = $region45
    $region44: #{tst_encoder_pallas.1} parent=1 // pred_region
      _
    $region45: #{tst_encoder_pallas.1} parent=1 // pred_fallthru
      _
    // Predicated region
    $region46: #{tst_encoder_pallas.1} parent=1 // pred_check
      _
    $region47: #{tst_encoder_pallas.1} parent=1 // pred_check_branch
      %88 = sbr.rel (0) target = $region49
    $region48: #{tst_encoder_pallas.1} parent=1 // pred_region
      _
    $region49: #{tst_encoder_pallas.1} parent=1 // pred_fallthru
      _
    // Predicated region
    $region50: #{tst_encoder_pallas.1} parent=1 // pred_check
      _
    $region51: #{tst_encoder_pallas.1} parent=1 // pred_check_branch
      %90 = sbr.rel (0) target = $region53
    $region52: #{tst_encoder_pallas.1} parent=1 // pred_region
      _
    $region53: #{tst_encoder_pallas.1} parent=1 // pred_fallthru
      _
    // Predicated region
    $region54: #{tst_encoder_pallas.1} parent=1 // pred_check
      _
    $region55: #{tst_encoder_pallas.1} parent=1 // pred_check_branch
      %92 = sbr.rel (0) target = $region57
    $region56: #{tst_encoder_pallas.1} parent=1 // pred_region
      _
    $region57: #{tst_encoder_pallas.1} parent=1 // pred_fallthru
      _
    // Predicated region
    $region58: #{tst_encoder_pallas.1} parent=1 // pred_check
      _
    $region59: #{tst_encoder_pallas.1} parent=1 // pred_check_branch
      %94 = sbr.rel (0) target = $region61
    $region60: #{tst_encoder_pallas.1} parent=1 // pred_region
      _
    $region61: #{tst_encoder_pallas.1} parent=1 // pred_fallthru
      _
    // Predicated region
    $region62: #{tst_encoder_pallas.1} parent=1 // pred_check
      _
    $region63: #{tst_encoder_pallas.1} parent=1 // pred_check_branch
      %96 = sbr.rel (0) target = $region65
    $region64: #{tst_encoder_pallas.1} parent=1 // pred_region
      _
    $region65: #{tst_encoder_pallas.1} parent=1 // pred_fallthru
      _
    // Predicated region
    $region66: #{tst_encoder_pallas.1} parent=1 // pred_check
      _
    $region67: #{tst_encoder_pallas.1} parent=1 // pred_check_branch
      %98 = sbr.rel (0) target = $region69
    $region68: #{tst_encoder_pallas.1} parent=1 // pred_region
      _
    $region69: #{tst_encoder_pallas.1} parent=1 // pred_fallthru
      _
    // Predicated region
    $region70: #{tst_encoder_pallas.1} parent=1 // pred_check
      _
    $region71: #{tst_encoder_pallas.1} parent=1 // pred_check_branch
      %100 = sbr.rel (0) target = $region73
    $region72: #{tst_encoder_pallas.1} parent=1 // pred_region
      %101 = dma.done [#allocation3], 32
    $region73: #{tst_encoder_pallas.1} parent=1 // pred_fallthru
      _
    // Predicated region
    $region74: #{tst_encoder_pallas.1} parent=1 // pred_check
      _
    $region75: #{tst_encoder_pallas.1} parent=1 // pred_check_branch
      %103 = sbr.rel (0) target = $region77
    $region76: #{tst_encoder_pallas.1} parent=1 // pred_region
      %104 = dma.done [#allocation5], 32
    $region77: #{tst_encoder_pallas.1} parent=1 // pred_fallthru
      _
    // Predicated region
    $region78: #{tst_encoder_pallas.1} parent=1 // pred_check
      _
    $region79: #{tst_encoder_pallas.1} parent=1 // pred_check_branch
      %106 = sbr.rel (0) target = $region81
    $region80: #{tst_encoder_pallas.1} parent=1 // pred_region
      %107 = dma.done [#allocation5], 32
    $region81: #{tst_encoder_pallas.1} parent=1 // pred_fallthru
      _
    // Predicated region
    $region82: #{tst_encoder_pallas.1} parent=1 // pred_check
      _
    $region83: #{tst_encoder_pallas.1} parent=1 // pred_check_branch
      %109 = sbr.rel (0) target = $region85
    $region84: #{tst_encoder_pallas.1} parent=1 // pred_region
      %110 = dma.done [#allocation8], 32
    $region85: #{tst_encoder_pallas.1} parent=1 // pred_fallthru
      _
    %v112 = vld [vmem:[%s0] sm:$0xff]
    %v113 = vld [vmem:[%s0 + $0x8] sm:$0xff]
    %v114 = vld [vmem:[%s0 + $0x10] sm:$0xff]
    %v115 = vld [vmem:[%s0 + $0x18] sm:$0xff]
    %v116 = vld [vmem:[%s13] sm:$0xff]
    %v117 = vld [vmem:[%s13 + $0x8] sm:$0xff]
    %v118 = vld [vmem:[%s13 + $0x10] sm:$0xff]
    %v119 = vld [vmem:[%s13 + $0x18] sm:$0xff]
    %v120 = vld [vmem:[%s14] sm:$0xff]
    %v121 = vld [vmem:[%s14 + $0x8] sm:$0xff]
    %v122 = vld [vmem:[%s14 + $0x10] sm:$0xff]
    %v123 = vld [vmem:[%s14 + $0x18] sm:$0xff]
    %v124 = vld [vmem:[%s14 + $0x20] sm:$0xff]
    %v125 = vld [vmem:[%s14 + $0x28] sm:$0xff]
    %v126 = vld [vmem:[%s14 + $0x30] sm:$0xff]
    %v127 = vld [vmem:[%s14 + $0x38] sm:$0xff]
    %v128 = vld [vmem:[%s14 + $0x40] sm:$0xff]
    %v129 = vld [vmem:[%s14 + $0x48] sm:$0xff]
    %v130 = vld [vmem:[%s14 + $0x50] sm:$0xff]
    %v131 = vld [vmem:[%s14 + $0x58] sm:$0xff]
    %v132 = vld [vmem:[%s14 + $0x60] sm:$0xff]
    %v133 = vld [vmem:[%s14 + $0x68] sm:$0xff]
    %v134 = vld [vmem:[%s14 + $0x70] sm:$0xff]
    %v135 = vld [vmem:[%s14 + $0x78] sm:$0xff]
    %v136 = vld [vmem:[%s15] sm:$0xff]
    %v137 = vld [vmem:[%s15 + $0x8] sm:$0xff]
    %v138 = vld [vmem:[%s15 + $0x10] sm:$0xff]
    %v139 = vld [vmem:[%s15 + $0x18] sm:$0xff]
    %v140 = vld [vmem:[%s15 + $0x20] sm:$0xff]
    %v141 = vld [vmem:[%s15 + $0x28] sm:$0xff]
    %v142 = vld [vmem:[%s15 + $0x30] sm:$0xff]
    %v143 = vld [vmem:[%s15 + $0x38] sm:$0xff]
    %v144 = vld [vmem:[%s15 + $0x40] sm:$0xff]
    %v145 = vld [vmem:[%s15 + $0x48] sm:$0xff]
    %v146 = vld [vmem:[%s15 + $0x50] sm:$0xff]
    %v147 = vld [vmem:[%s15 + $0x58] sm:$0xff]
    %v148 = vld [vmem:[%s15 + $0x60] sm:$0xff]
    %v149 = vld [vmem:[%s15 + $0x68] sm:$0xff]
    %v150 = vld [vmem:[%s15 + $0x70] sm:$0xff]
    %v151 = vld [vmem:[%s15 + $0x78] sm:$0xff]
    %v152 = vld [vmem:[%s16] sm:$0x1]
    %v153 = vpack.c.bf16 %v113, %v112
    %v154 = vpack.c.bf16 %v115, %v114
    %v155 = vld [vmem:[%s1] sm:$0xf]
    %v156 = vld [vmem:[%s1 + $0x4] sm:$0xf]
    %v157 = vld [vmem:[%s1 + $0x8] sm:$0xf]
    %v158 = vld [vmem:[%s1 + $0xc] sm:$0xf]
    %v159 = vld [vmem:[%s2] sm:$0x1]
    %v161 = vlaneseq
    %v162 = vshrl.u32 %v161, 7
    %v163 = vsub.s32 0, %v162
    %v164 = vrot.slane %v159, %v163
    %v170 = vunpack.c.l.b16 %v155
    %v171 = vunpack.c.l.b16 %v156
    %v172 = vunpack.c.l.b16 %v157
    %v173 = vunpack.c.l.b16 %v158
    %v174 = vpack.c.b16 %v171, %v170
    %v175 = vpack.c.b16 %v173, %v172
    %vm178 = vcmask 261120
    %v180 = vsel %vm178, %v153, 0
    %v183 = vsel %vm178, %v154, 0
    %185 = vmatprep.subr.bf16.mxu0 0
    %186 = vmatpush1.bf16.msra.mxu0 %v174
    %187 = vmatprep.subr.bf16.mxu0 0
    %188 = vmatpush1.bf16.msra.mxu0 %v175
    %189 = vmatprep.subr.bf16.mxu0 0
    %190 = vmatpush1.bf16.msra.mxu0 0
    %191 = vmatprep.subr.bf16.mxu0 0
    %192 = vmatpush1.bf16.msra.mxu0 0
    %193 = vmatprep.subr.bf16.mxu0 0
    %194 = vmatpush1.bf16.msra.mxu0 0
    %195 = vmatprep.subr.bf16.mxu0 0
    %196 = vmatpush1.bf16.msra.mxu0 0
    %197 = vmatprep.subr.bf16.mxu0 0
    %198 = vmatpush1.bf16.msra.mxu0 0
    %199 = vmatprep.subr.bf16.mxu0 0
    %200 = vmatpush1.bf16.msra.mxu0 0
    %201 = vmatprep.subr.bf16.mxu0 0
    %202 = vmatpush1.bf16.msra.mxu0 0
    %203 = vmatprep.subr.bf16.mxu0 0
    %204 = vmatpush1.bf16.msra.mxu0 0
    %205 = vmatprep.subr.bf16.mxu0 0
    %206 = vmatpush1.bf16.msra.mxu0 0
    %207 = vmatprep.subr.bf16.mxu0 0
    %208 = vmatpush1.bf16.msra.mxu0 0
    %209 = vmatprep.subr.bf16.mxu0 0
    %210 = vmatpush1.bf16.msra.mxu0 0
    %211 = vmatprep.subr.bf16.mxu0 0
    %212 = vmatpush1.bf16.msra.mxu0 0
    %213 = vmatprep.subr.bf16.mxu0 0
    %214 = vmatpush1.bf16.msra.mxu0 0
    %215 = vmatprep.subr.bf16.mxu0 0
    %216 = vmatpush1.bf16.msra.mxu0 0
    %217 = vmatprep.mubr.bf16.mxu0 0
    %218 = vmatmul.mubr.bf16.gmra.mrb[0].mxu0 %v180
    %v219 = vpop.f32.mrb[0].mxu0
    %v220 = vadd.f32 %v164, %v219
    %v221 = vpop.f32.mrb[0].mxu0
    %v222 = vpop.f32.mrb[0].mxu0
    %v223 = vadd.f32 %v164, %v222
    %v224 = vpop.f32.mrb[0].mxu0
    %225 = vmatprep.mubr.bf16.mxu0 0
    %226 = vmatmul.mubr.bf16.gmra.mrb[0].mxu0 %v183
    %v227 = vpop.f32.mrb[0].mxu0
    %v228 = vadd.f32 %v164, %v227
    %v229 = vpop.f32.mrb[0].mxu0
    %v230 = vpop.f32.mrb[0].mxu0
    %v231 = vadd.f32 %v164, %v230
    %v232 = vpop.f32.mrb[0].mxu0
    %233 = vdwg.mxu0
    %250 = vrot.lane.b32.xlu0 %v120, 32
    %v251 = vpop.permute.xlu0 %250
    %252 = vrot.lane.b32.xlu0 %v121, 32
    %v253 = vpop.permute.xlu0 %252
    %254 = vrot.lane.b32.xlu0 %v122, 32
    %v255 = vpop.permute.xlu0 %254
    %256 = vrot.lane.b32.xlu0 %v123, 32
    %v257 = vpop.permute.xlu0 %256
    %258 = vrot.lane.b32.xlu0 %v124, 32
    %v259 = vpop.permute.xlu0 %258
    %260 = vrot.lane.b32.xlu0 %v125, 32
    %v261 = vpop.permute.xlu0 %260
    %262 = vrot.lane.b32.xlu0 %v126, 32
    %v263 = vpop.permute.xlu0 %262
    %264 = vrot.lane.b32.xlu0 %v127, 32
    %v265 = vpop.permute.xlu0 %264
    %266 = vrot.lane.b32.xlu0 %v128, 32
    %v267 = vpop.permute.xlu0 %266
    %268 = vrot.lane.b32.xlu0 %v129, 32
    %v269 = vpop.permute.xlu0 %268
    %270 = vrot.lane.b32.xlu0 %v130, 32
    %v271 = vpop.permute.xlu0 %270
    %272 = vrot.lane.b32.xlu0 %v131, 32
    %v273 = vpop.permute.xlu0 %272
    %274 = vrot.lane.b32.xlu0 %v132, 32
    %v275 = vpop.permute.xlu0 %274
    %276 = vrot.lane.b32.xlu0 %v133, 32
    %v277 = vpop.permute.xlu0 %276
    %278 = vrot.lane.b32.xlu0 %v134, 32
    %v279 = vpop.permute.xlu0 %278
    %280 = vrot.lane.b32.xlu0 %v135, 32
    %v281 = vpop.permute.xlu0 %280
    %v298 = vmul.f32 %v220, %v251
    %v299 = vmul.f32 %v223, %v253
    %v300 = vmul.f32 %v228, %v255
    %v301 = vmul.f32 %v231, %v257
    %v302 = vmul.f32 %v220, %v259
    %v303 = vmul.f32 %v223, %v261
    %v304 = vmul.f32 %v228, %v263
    %v305 = vmul.f32 %v231, %v265
    %v306 = vmul.f32 %v220, %v267
    %v307 = vmul.f32 %v223, %v269
    %v308 = vmul.f32 %v228, %v271
    %v309 = vmul.f32 %v231, %v273
    %v310 = vmul.f32 %v220, %v275
    %v311 = vmul.f32 %v223, %v277
    %v312 = vmul.f32 %v228, %v279
    %v313 = vmul.f32 %v231, %v281
    %314 = vrot.lane.b32.xlu0 %v120, 64
    %v315 = vpop.permute.xlu0 %314
    %316 = vrot.lane.b32.xlu0 %v121, 64
    %v317 = vpop.permute.xlu0 %316
    %318 = vrot.lane.b32.xlu0 %v122, 64
    %v319 = vpop.permute.xlu0 %318
    %320 = vrot.lane.b32.xlu0 %v123, 64
    %v321 = vpop.permute.xlu0 %320
    %322 = vrot.lane.b32.xlu0 %v124, 64
    %v323 = vpop.permute.xlu0 %322
    %324 = vrot.lane.b32.xlu0 %v125, 64
    %v325 = vpop.permute.xlu0 %324
    %326 = vrot.lane.b32.xlu0 %v126, 64
    %v327 = vpop.permute.xlu0 %326
    %328 = vrot.lane.b32.xlu0 %v127, 64
    %v329 = vpop.permute.xlu0 %328
    %330 = vrot.lane.b32.xlu0 %v128, 64
    %v331 = vpop.permute.xlu0 %330
    %332 = vrot.lane.b32.xlu0 %v129, 64
    %v333 = vpop.permute.xlu0 %332
    %334 = vrot.lane.b32.xlu0 %v130, 64
    %v335 = vpop.permute.xlu0 %334
    %336 = vrot.lane.b32.xlu0 %v131, 64
    %v337 = vpop.permute.xlu0 %336
    %338 = vrot.lane.b32.xlu0 %v132, 64
    %v339 = vpop.permute.xlu0 %338
    %340 = vrot.lane.b32.xlu0 %v133, 64
    %v341 = vpop.permute.xlu0 %340
    %342 = vrot.lane.b32.xlu0 %v134, 64
    %v343 = vpop.permute.xlu0 %342
    %344 = vrot.lane.b32.xlu0 %v135, 64
    %v345 = vpop.permute.xlu0 %344
    %v362 = vmul.f32 %v220, %v315
    %v363 = vmul.f32 %v223, %v317
    %v364 = vmul.f32 %v228, %v319
    %v365 = vmul.f32 %v231, %v321
    %v366 = vmul.f32 %v220, %v323
    %v367 = vmul.f32 %v223, %v325
    %v368 = vmul.f32 %v228, %v327
    %v369 = vmul.f32 %v231, %v329
    %v370 = vmul.f32 %v220, %v331
    %v371 = vmul.f32 %v223, %v333
    %v372 = vmul.f32 %v228, %v335
    %v373 = vmul.f32 %v231, %v337
    %v374 = vmul.f32 %v220, %v339
    %v375 = vmul.f32 %v223, %v341
    %v376 = vmul.f32 %v228, %v343
    %v377 = vmul.f32 %v231, %v345
    %v378 = vpack.c.bf16 %v223, %v220
    %v379 = vpack.c.bf16 %v231, %v228
    %v380 = vpack.c.bf16 %v299, %v298
    %v381 = vpack.c.bf16 %v301, %v300
    %v382 = vpack.c.bf16 %v303, %v302
    %v383 = vpack.c.bf16 %v305, %v304
    %v384 = vpack.c.bf16 %v307, %v306
    %v385 = vpack.c.bf16 %v309, %v308
    %v386 = vpack.c.bf16 %v311, %v310
    %v387 = vpack.c.bf16 %v313, %v312
    %396 = vrot.lane.b32.xlu0 %v380, 96
    %v397 = vpop.permute.xlu0 %396
    %398 = vrot.lane.b32.xlu0 %v381, 96
    %v399 = vpop.permute.xlu0 %398
    %400 = vrot.lane.b32.xlu0 %v382, 96
    %v401 = vpop.permute.xlu0 %400
    %402 = vrot.lane.b32.xlu0 %v383, 96
    %v403 = vpop.permute.xlu0 %402
    %404 = vrot.lane.b32.xlu0 %v384, 96
    %v405 = vpop.permute.xlu0 %404
    %406 = vrot.lane.b32.xlu0 %v385, 96
    %v407 = vpop.permute.xlu0 %406
    %408 = vrot.lane.b32.xlu0 %v386, 96
    %v409 = vpop.permute.xlu0 %408
    %410 = vrot.lane.b32.xlu0 %v387, 96
    %v411 = vpop.permute.xlu0 %410
    %v413 = vsel %vm178, %v378, 0
    %v416 = vsel %vm178, %v379, 0
    %v419 = vsel %vm178, %v397, 0
    %v422 = vsel %vm178, %v399, 0
    %v425 = vsel %vm178, %v401, 0
    %v428 = vsel %vm178, %v403, 0
    %v431 = vsel %vm178, %v405, 0
    %v434 = vsel %vm178, %v407, 0
    %v437 = vsel %vm178, %v409, 0
    %v440 = vsel %vm178, %v411, 0
    %442 = vmatprep.subr.bf16.mxu0 0
    %443 = vmatpush1.bf16.xpose.msra.mxu0 %v419
    %444 = vmatprep.subr.bf16.mxu0 0
    %445 = vmatpush1.bf16.xpose.msra.mxu0 %v422
    %446 = vmatprep.subr.bf16.mxu0 0
    %447 = vmatpush1.bf16.xpose.msra.mxu0 %v425
    %448 = vmatprep.subr.bf16.mxu0 0
    %449 = vmatpush1.bf16.xpose.msra.mxu0 %v428
    %450 = vmatprep.subr.bf16.mxu0 0
    %451 = vmatpush1.bf16.xpose.msra.mxu0 %v431
    %452 = vmatprep.subr.bf16.mxu0 0
    %453 = vmatpush1.bf16.xpose.msra.mxu0 %v434
    %454 = vmatprep.subr.bf16.mxu0 0
    %455 = vmatpush1.bf16.xpose.msra.mxu0 %v437
    %456 = vmatprep.subr.bf16.mxu0 0
    %457 = vmatpush1.bf16.xpose.msra.mxu0 %v440
    %458 = vmatprep.subr.bf16.mxu0 0
    %459 = vmatpush1.bf16.xpose.msra.mxu0 0
    %460 = vmatprep.subr.bf16.mxu0 0
    %461 = vmatpush1.bf16.xpose.msra.mxu0 0
    %462 = vmatprep.subr.bf16.mxu0 0
    %463 = vmatpush1.bf16.xpose.msra.mxu0 0
    %464 = vmatprep.subr.bf16.mxu0 0
    %465 = vmatpush1.bf16.xpose.msra.mxu0 0
    %466 = vmatprep.subr.bf16.mxu0 0
    %467 = vmatpush1.bf16.xpose.msra.mxu0 0
    %468 = vmatprep.subr.bf16.mxu0 0
    %469 = vmatpush1.bf16.xpose.msra.mxu0 0
    %470 = vmatprep.subr.bf16.mxu0 0
    %471 = vmatpush1.bf16.xpose.msra.mxu0 0
    %472 = vmatprep.subr.bf16.mxu0 0
    %473 = vmatpush1.bf16.xpose.msra.mxu0 0
    %474 = vmatprep.mubr.bf16.mxu0 0
    %475 = vmatmul.mubr.bf16.gmra.mrb[0].mxu0 %v413
    %v476 = vpop.f32.mrb[0].mxu0
    %v477 = vadd.f32 %v116, %v476
    %v478 = vpop.f32.mrb[0].mxu0
    %v479 = vpop.f32.mrb[0].mxu0
    %v480 = vadd.f32 %v117, %v479
    %v481 = vpop.f32.mrb[0].mxu0
    %482 = vmatprep.mubr.bf16.mxu0 0
    %483 = vmatmul.mubr.bf16.gmra.mrb[0].mxu0 %v416
    %v484 = vpop.f32.mrb[0].mxu0
    %v485 = vadd.f32 %v118, %v484
    %v486 = vpop.f32.mrb[0].mxu0
    %v487 = vpop.f32.mrb[0].mxu0
    %v488 = vadd.f32 %v119, %v487
    %v489 = vpop.f32.mrb[0].mxu0
    %490 = vdwg.mxu0
    %491 = vmax.xlane.f32.xlu0 %v477
    %v492 = vpop.xlane.xlu0 %491
    %493 = vmax.xlane.f32.xlu0 %v480
    %v494 = vpop.xlane.xlu0 %493
    %495 = vmax.xlane.f32.xlu0 %v485
    %v496 = vpop.xlane.xlu0 %495
    %497 = vmax.xlane.f32.xlu0 %v488
    %v498 = vpop.xlane.xlu0 %497
    %v499 = vsub.f32 %v477, %v492
    %v500 = vsub.f32 %v480, %v494
    %v501 = vsub.f32 %v485, %v496
    %v502 = vsub.f32 %v488, %v498
    %v503 = vmul.f32 %v499, 1.442695
    %v504 = vpow.pop %v503
    %v505 = vmul.f32 %v500, 1.442695
    %v506 = vpow.pop %v505
    %v507 = vmul.f32 %v501, 1.442695
    %v508 = vpow.pop %v507
    %v509 = vmul.f32 %v502, 1.442695
    %v510 = vpow.pop %v509
    %511 = vmatprep.subr.mxu0 0.0
    %512 = vmatpush1.msra.mxu0 %v136
    %513 = vmatprep.subr.mxu0 0.0
    %514 = vmatpush1.msra.mxu0 %v137
    %515 = vmatprep.subr.mxu0 0.0
    %516 = vmatpush1.msra.mxu0 %v138
    %517 = vmatprep.subr.mxu0 0.0
    %518 = vmatpush1.msra.mxu0 %v139
    %519 = vmatprep.subr.mxu0 0.0
    %520 = vmatpush1.msra.mxu0 %v140
    %521 = vmatprep.subr.mxu0 0.0
    %522 = vmatpush1.msra.mxu0 %v141
    %523 = vmatprep.subr.mxu0 0.0
    %524 = vmatpush1.msra.mxu0 %v142
    %525 = vmatprep.subr.mxu0 0.0
    %526 = vmatpush1.msra.mxu0 %v143
    %527 = vmatprep.subr.mxu0 0.0
    %528 = vmatpush1.msra.mxu0 %v144
    %529 = vmatprep.subr.mxu0 0.0
    %530 = vmatpush1.msra.mxu0 %v145
    %531 = vmatprep.subr.mxu0 0.0
    %532 = vmatpush1.msra.mxu0 %v146
    %533 = vmatprep.subr.mxu0 0.0
    %534 = vmatpush1.msra.mxu0 %v147
    %535 = vmatprep.subr.mxu0 0.0
    %536 = vmatpush1.msra.mxu0 %v148
    %537 = vmatprep.subr.mxu0 0.0
    %538 = vmatpush1.msra.mxu0 %v149
    %539 = vmatprep.subr.mxu0 0.0
    %540 = vmatpush1.msra.mxu0 %v150
    %541 = vmatprep.subr.mxu0 0.0
    %542 = vmatpush1.msra.mxu0 %v151
    %543 = vmatprep.subr.mxu0 0.0
    %544 = vmatpush1.msra.mxu0 0.0
    %545 = vmatprep.subr.mxu0 0.0
    %546 = vmatpush1.msra.mxu0 0.0
    %547 = vmatprep.subr.mxu0 0.0
    %548 = vmatpush1.msra.mxu0 0.0
    %549 = vmatprep.subr.mxu0 0.0
    %550 = vmatpush1.msra.mxu0 0.0
    %551 = vmatprep.subr.mxu0 0.0
    %552 = vmatpush1.msra.mxu0 0.0
    %553 = vmatprep.subr.mxu0 0.0
    %554 = vmatpush1.msra.mxu0 0.0
    %555 = vmatprep.subr.mxu0 0.0
    %556 = vmatpush1.msra.mxu0 0.0
    %557 = vmatprep.subr.mxu0 0.0
    %558 = vmatpush1.msra.mxu0 0.0
    %559 = vmatprep.subr.mxu0 0.0
    %560 = vmatpush1.msra.mxu0 0.0
    %561 = vmatprep.subr.mxu0 0.0
    %562 = vmatpush1.msra.mxu0 0.0
    %563 = vmatprep.subr.mxu0 0.0
    %564 = vmatpush1.msra.mxu0 0.0
    %565 = vmatprep.subr.mxu0 0.0
    %566 = vmatpush1.msra.mxu0 0.0
    %567 = vmatprep.subr.mxu0 0.0
    %568 = vmatpush1.msra.mxu0 0.0
    %569 = vmatprep.subr.mxu0 0.0
    %570 = vmatpush1.msra.mxu0 0.0
    %571 = vmatprep.subr.mxu0 0.0
    %572 = vmatpush1.msra.mxu0 0.0
    %573 = vmatprep.subr.mxu0 0.0
    %574 = vmatpush1.msra.mxu0 0.0
    %575 = vmatprep.mubr.f32.mxu0 0.0
    %576 = vmatmul.mubr.f32.gmra.mrb[0].mxu0 %v504
    %v577 = vpop.f32.mrb[0].mxu0
    %v578 = vadd.f32 0.0, %v577
    %v579 = vpop.f32.mrb[0].mxu0
    %580 = vmatprep.mubr.f32.mxu0 0.0
    %581 = vmatmul.mubr.f32.gmra.mrb[0].mxu0 %v506
    %v582 = vpop.f32.mrb[0].mxu0
    %v583 = vadd.f32 0.0, %v582
    %v584 = vpop.f32.mrb[0].mxu0
    %585 = vmatprep.mubr.f32.mxu0 0.0
    %586 = vmatmul.mubr.f32.gmra.mrb[0].mxu0 %v508
    %v587 = vpop.f32.mrb[0].mxu0
    %v588 = vadd.f32 0.0, %v587
    %v589 = vpop.f32.mrb[0].mxu0
    %590 = vmatprep.mubr.f32.mxu0 0.0
    %591 = vmatmul.mubr.f32.gmra.mrb[0].mxu0 %v510
    %v592 = vpop.f32.mrb[0].mxu0
    %v593 = vadd.f32 0.0, %v592
    %v594 = vpop.f32.mrb[0].mxu0
    %595 = vdwg.mxu0
    %v596 = vrcp.pop %v578
    %v597 = vrcp.pop %v583
    %v598 = vrcp.pop %v588
    %v599 = vrcp.pop %v593
    %v600 = vmul.f32 %v504, %v596
    %v601 = vmul.f32 %v506, %v597
    %v602 = vmul.f32 %v508, %v598
    %v603 = vmul.f32 %v510, %v599
    %v604 = vpack.c.bf16 %v601, %v600
    %v605 = vpack.c.bf16 %v603, %v602
    %v606 = vpack.c.bf16 %v363, %v362
    %v607 = vpack.c.bf16 %v365, %v364
    %v608 = vpack.c.bf16 %v367, %v366
    %v609 = vpack.c.bf16 %v369, %v368
    %v610 = vpack.c.bf16 %v371, %v370
    %v611 = vpack.c.bf16 %v373, %v372
    %v612 = vpack.c.bf16 %v375, %v374
    %v613 = vpack.c.bf16 %v377, %v376
    %622 = vrot.lane.b32.xlu0 %v606, 64
    %v623 = vpop.permute.xlu0 %622
    %624 = vrot.lane.b32.xlu0 %v607, 64
    %v625 = vpop.permute.xlu0 %624
    %626 = vrot.lane.b32.xlu0 %v608, 64
    %v627 = vpop.permute.xlu0 %626
    %628 = vrot.lane.b32.xlu0 %v609, 64
    %v629 = vpop.permute.xlu0 %628
    %630 = vrot.lane.b32.xlu0 %v610, 64
    %v631 = vpop.permute.xlu0 %630
    %632 = vrot.lane.b32.xlu0 %v611, 64
    %v633 = vpop.permute.xlu0 %632
    %634 = vrot.lane.b32.xlu0 %v612, 64
    %v635 = vpop.permute.xlu0 %634
    %636 = vrot.lane.b32.xlu0 %v613, 64
    %v637 = vpop.permute.xlu0 %636
    %646 = vmatprep.subr.bf16.mxu0 0
    %647 = vmatpush1.bf16.msra.mxu0 %v623
    %648 = vmatprep.subr.bf16.mxu0 0
    %649 = vmatpush1.bf16.msra.mxu0 %v625
    %650 = vmatprep.subr.bf16.mxu0 0
    %651 = vmatpush1.bf16.msra.mxu0 %v627
    %652 = vmatprep.subr.bf16.mxu0 0
    %653 = vmatpush1.bf16.msra.mxu0 %v629
    %654 = vmatprep.subr.bf16.mxu0 0
    %655 = vmatpush1.bf16.msra.mxu0 %v631
    %656 = vmatprep.subr.bf16.mxu0 0
    %657 = vmatpush1.bf16.msra.mxu0 %v633
    %658 = vmatprep.subr.bf16.mxu0 0
    %659 = vmatpush1.bf16.msra.mxu0 %v635
    %660 = vmatprep.subr.bf16.mxu0 0
    %661 = vmatpush1.bf16.msra.mxu0 %v637
    %662 = vmatprep.subr.bf16.mxu0 0
    %663 = vmatpush1.bf16.msra.mxu0 0
    %664 = vmatprep.subr.bf16.mxu0 0
    %665 = vmatpush1.bf16.msra.mxu0 0
    %666 = vmatprep.subr.bf16.mxu0 0
    %667 = vmatpush1.bf16.msra.mxu0 0
    %668 = vmatprep.subr.bf16.mxu0 0
    %669 = vmatpush1.bf16.msra.mxu0 0
    %670 = vmatprep.subr.bf16.mxu0 0
    %671 = vmatpush1.bf16.msra.mxu0 0
    %672 = vmatprep.subr.bf16.mxu0 0
    %673 = vmatpush1.bf16.msra.mxu0 0
    %674 = vmatprep.subr.bf16.mxu0 0
    %675 = vmatpush1.bf16.msra.mxu0 0
    %676 = vmatprep.subr.bf16.mxu0 0
    %677 = vmatpush1.bf16.msra.mxu0 0
    %678 = vmatprep.mubr.bf16.mxu0 0
    %679 = vmatmul.mubr.bf16.gmra.mrb[0].mxu0 %v604
    %v680 = vpop.f32.mrb[0].mxu0
    %v681 = vadd.f32 0.0, %v680
    %v682 = vpop.f32.mrb[0].mxu0
    %v683 = vpop.f32.mrb[0].mxu0
    %v684 = vadd.f32 0.0, %v683
    %v685 = vpop.f32.mrb[0].mxu0
    %686 = vmatprep.mubr.bf16.mxu0 0
    %687 = vmatmul.mubr.bf16.gmra.mrb[0].mxu0 %v605
    %v688 = vpop.f32.mrb[0].mxu0
    %v689 = vadd.f32 0.0, %v688
    %v690 = vpop.f32.mrb[0].mxu0
    %v691 = vpop.f32.mrb[0].mxu0
    %v692 = vadd.f32 0.0, %v691
    %v693 = vpop.f32.mrb[0].mxu0
    %694 = vdwg.mxu0
    %v695 = vpack.c.bf16 %v684, %v681
    %v696 = vpack.c.bf16 %v692, %v689
    %v697 = vld [vmem:[%s3] sm:$0xf]
    %v698 = vld [vmem:[%s3 + $0x4] sm:$0xf]
    %v699 = vld [vmem:[%s3 + $0x8] sm:$0xf]
    %v700 = vld [vmem:[%s3 + $0xc] sm:$0xf]
    %v701 = vld [vmem:[#allocation2] sm:$0x1]
    %v703 = vlaneseq
    %v704 = vshrl.u32 %v703, 7
    %v705 = vsub.s32 0, %v704
    %v706 = vrot.slane %v701, %v705
    %v712 = vunpack.c.l.b16 %v697
    %v713 = vunpack.c.l.b16 %v698
    %v714 = vunpack.c.l.b16 %v699
    %v715 = vunpack.c.l.b16 %v700
    %v716 = vpack.c.b16 %v713, %v712
    %v717 = vpack.c.b16 %v715, %v714
    %v721 = vsel %vm178, %v695, 0
    %v724 = vsel %vm178, %v696, 0
    %726 = vmatprep.subr.bf16.mxu0 0
    %727 = vmatpush1.bf16.msra.mxu0 %v716
    %728 = vmatprep.subr.bf16.mxu0 0
    %729 = vmatpush1.bf16.msra.mxu0 %v717
    %730 = vmatprep.subr.bf16.mxu0 0
    %731 = vmatpush1.bf16.msra.mxu0 0
    %732 = vmatprep.subr.bf16.mxu0 0
    %733 = vmatpush1.bf16.msra.mxu0 0
    %734 = vmatprep.subr.bf16.mxu0 0
    %735 = vmatpush1.bf16.msra.mxu0 0
    %736 = vmatprep.subr.bf16.mxu0 0
    %737 = vmatpush1.bf16.msra.mxu0 0
    %738 = vmatprep.subr.bf16.mxu0 0
    %739 = vmatpush1.bf16.msra.mxu0 0
    %740 = vmatprep.subr.bf16.mxu0 0
    %741 = vmatpush1.bf16.msra.mxu0 0
    %742 = vmatprep.subr.bf16.mxu0 0
    %743 = vmatpush1.bf16.msra.mxu0 0
    %744 = vmatprep.subr.bf16.mxu0 0
    %745 = vmatpush1.bf16.msra.mxu0 0
    %746 = vmatprep.subr.bf16.mxu0 0
    %747 = vmatpush1.bf16.msra.mxu0 0
    %748 = vmatprep.subr.bf16.mxu0 0
    %749 = vmatpush1.bf16.msra.mxu0 0
    %750 = vmatprep.subr.bf16.mxu0 0
    %751 = vmatpush1.bf16.msra.mxu0 0
    %752 = vmatprep.subr.bf16.mxu0 0
    %753 = vmatpush1.bf16.msra.mxu0 0
    %754 = vmatprep.subr.bf16.mxu0 0
    %755 = vmatpush1.bf16.msra.mxu0 0
    %756 = vmatprep.subr.bf16.mxu0 0
    %757 = vmatpush1.bf16.msra.mxu0 0
    %758 = vmatprep.mubr.bf16.mxu0 0
    %759 = vmatmul.mubr.bf16.gmra.mrb[0].mxu0 %v721
    %v760 = vpop.f32.mrb[0].mxu0
    %v761 = vadd.f32 %v706, %v760
    %v762 = vpop.f32.mrb[0].mxu0
    %v763 = vpop.f32.mrb[0].mxu0
    %v764 = vadd.f32 %v706, %v763
    %v765 = vpop.f32.mrb[0].mxu0
    %766 = vmatprep.mubr.bf16.mxu0 0
    %767 = vmatmul.mubr.bf16.gmra.mrb[0].mxu0 %v724
    %v768 = vpop.f32.mrb[0].mxu0
    %v769 = vadd.f32 %v706, %v768
    %v770 = vpop.f32.mrb[0].mxu0
    %v771 = vpop.f32.mrb[0].mxu0
    %v772 = vadd.f32 %v706, %v771
    %v773 = vpop.f32.mrb[0].mxu0
    %774 = vdwg.mxu0
    %v775 = vadd.f32 %v112, %v761
    %v776 = vadd.f32 %v113, %v764
    %v777 = vadd.f32 %v114, %v769
    %v778 = vadd.f32 %v115, %v772
    %v779 = vld [vmem:[#allocation4] sm:$0x1]
    %v780 = vld [vmem:[#allocation6] sm:$0x1]
    %v781 = vmul.f32 %v775, %v775
    %v782 = vmul.f32 %v776, %v776
    %v783 = vmul.f32 %v777, %v777
    %v784 = vmul.f32 %v778, %v778
    %789 = vrot.lane.b32.xlu0 %v781, 32
    %v790 = vpop.permute.xlu0 %789
    %791 = vrot.lane.b32.xlu0 %v782, 32
    %v792 = vpop.permute.xlu0 %791
    %793 = vrot.lane.b32.xlu0 %v783, 32
    %v794 = vpop.permute.xlu0 %793
    %795 = vrot.lane.b32.xlu0 %v784, 32
    %v796 = vpop.permute.xlu0 %795
    %v801 = vsel %vm178, %v775, %v790
    %v802 = vsel %vm178, %v776, %v792
    %v803 = vsel %vm178, %v777, %v794
    %v804 = vsel %vm178, %v778, %v796
    %v806 = vsel %vm178, %v152, 0
    %808 = vmatprep.subr.mxu0 0.0
    %809 = vmatpush1.msra.mxu0 %v801
    %810 = vmatprep.subr.mxu0 0.0
    %811 = vmatpush1.msra.mxu0 %v802
    %812 = vmatprep.subr.mxu0 0.0
    %813 = vmatpush1.msra.mxu0 %v803
    %814 = vmatprep.subr.mxu0 0.0
    %815 = vmatpush1.msra.mxu0 %v804
    %816 = vmatprep.subr.mxu0 0.0
    %817 = vmatpush1.msra.mxu0 0.0
    %818 = vmatprep.subr.mxu0 0.0
    %819 = vmatpush1.msra.mxu0 0.0
    %820 = vmatprep.subr.mxu0 0.0
    %821 = vmatpush1.msra.mxu0 0.0
    %822 = vmatprep.subr.mxu0 0.0
    %823 = vmatpush1.msra.mxu0 0.0
    %824 = vmatprep.subr.mxu0 0.0
    %825 = vmatpush1.msra.mxu0 0.0
    %826 = vmatprep.subr.mxu0 0.0
    %827 = vmatpush1.msra.mxu0 0.0
    %828 = vmatprep.subr.mxu0 0.0
    %829 = vmatpush1.msra.mxu0 0.0
    %830 = vmatprep.subr.mxu0 0.0
    %831 = vmatpush1.msra.mxu0 0.0
    %832 = vmatprep.subr.mxu0 0.0
    %833 = vmatpush1.msra.mxu0 0.0
    %834 = vmatprep.subr.mxu0 0.0
    %835 = vmatpush1.msra.mxu0 0.0
    %836 = vmatprep.subr.mxu0 0.0
    %837 = vmatpush1.msra.mxu0 0.0
    %838 = vmatprep.subr.mxu0 0.0
    %839 = vmatpush1.msra.mxu0 0.0
    %840 = vmatprep.subr.mxu0 0.0
    %841 = vmatpush1.msra.mxu0 0.0
    %842 = vmatprep.subr.mxu0 0.0
    %843 = vmatpush1.msra.mxu0 0.0
    %844 = vmatprep.subr.mxu0 0.0
    %845 = vmatpush1.msra.mxu0 0.0
    %846 = vmatprep.subr.mxu0 0.0
    %847 = vmatpush1.msra.mxu0 0.0
    %848 = vmatprep.subr.mxu0 0.0
    %849 = vmatpush1.msra.mxu0 0.0
    %850 = vmatprep.subr.mxu0 0.0
    %851 = vmatpush1.msra.mxu0 0.0
    %852 = vmatprep.subr.mxu0 0.0
    %853 = vmatpush1.msra.mxu0 0.0
    %854 = vmatprep.subr.mxu0 0.0
    %855 = vmatpush1.msra.mxu0 0.0
    %856 = vmatprep.subr.mxu0 0.0
    %857 = vmatpush1.msra.mxu0 0.0
    %858 = vmatprep.subr.mxu0 0.0
    %859 = vmatpush1.msra.mxu0 0.0
    %860 = vmatprep.subr.mxu0 0.0
    %861 = vmatpush1.msra.mxu0 0.0
    %862 = vmatprep.subr.mxu0 0.0
    %863 = vmatpush1.msra.mxu0 0.0
    %864 = vmatprep.subr.mxu0 0.0
    %865 = vmatpush1.msra.mxu0 0.0
    %866 = vmatprep.subr.mxu0 0.0
    %867 = vmatpush1.msra.mxu0 0.0
    %868 = vmatprep.subr.mxu0 0.0
    %869 = vmatpush1.msra.mxu0 0.0
    %870 = vmatprep.subr.mxu0 0.0
    %871 = vmatpush1.msra.mxu0 0.0
    %872 = vmatprep.mubr.f32.mxu0 0.0
    %873 = vmatmul.mubr.f32.gmra.mrb[0].mxu0 %v806
    %v874 = vpop.f32.mrb[0].mxu0
    %v875 = vadd.f32 0.0, %v874
    %v876 = vpop.f32.mrb[0].mxu0
    %877 = vdwg.mxu0
    %v878 = vmul.f32 %v875, 0.03125
    %v879 = vmul.f32 %v878, %v878
    %881 = vrot.lane.b32.xlu0 %v879, 32
    %v882 = vpop.permute.xlu0 %881
    %v884 = vsub.f32 %v878, %v882
    %v885 = vadd.f32 %v884, 1e-05
    %v886 = vrsqrt.pop %v885
    %v889 = vunpack.c.l.s4 1966171168
    %v890 = vunpack.c.0.s8 %v889
    %v891 = vlaneseq
    %v892 = vshrl.u32 %v891, 7
    %v893 = vsub.s32 %v890, %v892
    %v894 = vrot.slane %v886, %v893
    %v896 = vunpack.c.l.s4 1966171168
    %v897 = vunpack.c.0.s8 %v896
    %v898 = vlaneseq
    %v899 = vshrl.u32 %v898, 7
    %v900 = vsub.s32 %v897, %v899
    %v901 = vrot.slane %v894, %v900
    %902 = vrot.lane.b32.xlu0 %v901, 96
    %v903 = vpop.permute.xlu0 %902
    %v905 = vmul.f32 %v779, %v903
    %v907 = vlaneseq
    %v908 = vshrl.u32 %v907, 7
    %v909 = vsub.s32 0, %v908
    %v910 = vrot.slane %v905, %v909
    %v912 = vmul.f32 %v775, %v910
    %v913 = vmul.f32 %v776, %v910
    %v914 = vmul.f32 %v777, %v910
    %v915 = vmul.f32 %v778, %v910
    %v916 = vmul.f32 %v878, %v905
    %v917 = vsub.f32 %v780, %v916
    %v919 = vlaneseq
    %v920 = vshrl.u32 %v919, 7
    %v921 = vsub.s32 0, %v920
    %v922 = vrot.slane %v917, %v921
    %v924 = vadd.f32 %v912, %v922
    %v925 = vadd.f32 %v913, %v922
    %v926 = vadd.f32 %v914, %v922
    %v927 = vadd.f32 %v915, %v922
    %v928 = vpack.c.bf16 %v925, %v924
    %v929 = vpack.c.bf16 %v927, %v926
    %v930 = vld [vmem:[%s7] sm:$0xf]
    %v931 = vld [vmem:[%s7 + $0x4] sm:$0xf]
    %v932 = vld [vmem:[%s7 + $0x8] sm:$0xf]
    %v933 = vld [vmem:[%s7 + $0xc] sm:$0xf]
    %v934 = vld [vmem:[#allocation7] sm:$0x1]
    %v936 = vlaneseq
    %v937 = vshrl.u32 %v936, 7
    %v938 = vsub.s32 0, %v937
    %v939 = vrot.slane %v934, %v938
    %v945 = vunpack.c.l.b16 %v930
    %v946 = vunpack.c.l.b16 %v931
    %v947 = vunpack.c.l.b16 %v932
    %v948 = vunpack.c.l.b16 %v933
    %v949 = vpack.c.b16 %v946, %v945
    %v950 = vpack.c.b16 %v948, %v947
    %v954 = vsel %vm178, %v928, 0
    %v957 = vsel %vm178, %v929, 0
    %959 = vmatprep.subr.bf16.mxu0 0
    %960 = vmatpush1.bf16.msra.mxu0 %v949
    %961 = vmatprep.subr.bf16.mxu0 0
    %962 = vmatpush1.bf16.msra.mxu0 %v950
    %963 = vmatprep.subr.bf16.mxu0 0
    %964 = vmatpush1.bf16.msra.mxu0 0
    %965 = vmatprep.subr.bf16.mxu0 0
    %966 = vmatpush1.bf16.msra.mxu0 0
    %967 = vmatprep.subr.bf16.mxu0 0
    %968 = vmatpush1.bf16.msra.mxu0 0
    %969 = vmatprep.subr.bf16.mxu0 0
    %970 = vmatpush1.bf16.msra.mxu0 0
    %971 = vmatprep.subr.bf16.mxu0 0
    %972 = vmatpush1.bf16.msra.mxu0 0
    %973 = vmatprep.subr.bf16.mxu0 0
    %974 = vmatpush1.bf16.msra.mxu0 0
    %975 = vmatprep.subr.bf16.mxu0 0
    %976 = vmatpush1.bf16.msra.mxu0 0
    %977 = vmatprep.subr.bf16.mxu0 0
    %978 = vmatpush1.bf16.msra.mxu0 0
    %979 = vmatprep.subr.bf16.mxu0 0
    %980 = vmatpush1.bf16.msra.mxu0 0
    %981 = vmatprep.subr.bf16.mxu0 0
    %982 = vmatpush1.bf16.msra.mxu0 0
    %983 = vmatprep.subr.bf16.mxu0 0
    %984 = vmatpush1.bf16.msra.mxu0 0
    %985 = vmatprep.subr.bf16.mxu0 0
    %986 = vmatpush1.bf16.msra.mxu0 0
    %987 = vmatprep.subr.bf16.mxu0 0
    %988 = vmatpush1.bf16.msra.mxu0 0
    %989 = vmatprep.subr.bf16.mxu0 0
    %990 = vmatpush1.bf16.msra.mxu0 0
    %991 = vmatprep.mubr.bf16.mxu0 0
    %992 = vmatmul.mubr.bf16.gmra.mrb[0].mxu0 %v954
    %v993 = vpop.f32.mrb[0].mxu0
    %v994 = vadd.f32 %v939, %v993
    %v995 = vpop.f32.mrb[0].mxu0
    %v996 = vpop.f32.mrb[0].mxu0
    %v997 = vadd.f32 %v939, %v996
    %v998 = vpop.f32.mrb[0].mxu0
    %999 = vmatprep.mubr.bf16.mxu0 0
    %1000 = vmatmul.mubr.bf16.gmra.mrb[0].mxu0 %v957
    %v1001 = vpop.f32.mrb[0].mxu0
    %v1002 = vadd.f32 %v939, %v1001
    %v1003 = vpop.f32.mrb[0].mxu0
    %v1004 = vpop.f32.mrb[0].mxu0
    %v1005 = vadd.f32 %v939, %v1004
    %v1006 = vpop.f32.mrb[0].mxu0
    %1007 = vdwg.mxu0
    %v1008 = vmul.f32 %v994, 0.5
    %v1009 = vmul.f32 %v997, 0.5
    %v1010 = vmul.f32 %v1002, 0.5
    %v1011 = vmul.f32 %v1005, 0.5
    %v1012 = vmul.f32 %v994, 0.70710677
    %v1013 = vmul.f32 %v997, 0.70710677
    %v1014 = vmul.f32 %v1002, 0.70710677
    %v1015 = vmul.f32 %v1005, 0.70710677
    %vm1016 = vcmp.ge.f32.partialorder %v1012, 0.0
    %vm1017 = vcmp.ge.f32.partialorder %v1013, 0.0
    %vm1018 = vcmp.ge.f32.partialorder %v1014, 0.0
    %vm1019 = vcmp.ge.f32.partialorder %v1015, 0.0
    %v1020 = vsel %vm1016, 1.0, -1.0
    %v1021 = vsel %vm1017, 1.0, -1.0
    %v1022 = vsel %vm1018, 1.0, -1.0
    %v1023 = vsel %vm1019, 1.0, -1.0
    %v1024 = vand.u32 2147483647, %v1012
    %v1025 = vand.u32 2147483647, %v1013
    %v1026 = vand.u32 2147483647, %v1014
    %v1027 = vand.u32 2147483647, %v1015
    %v1028 = vmul.f32 %v1024, 0.3275911
    %v1029 = vmul.f32 %v1025, 0.3275911
    %v1030 = vmul.f32 %v1026, 0.3275911
    %v1031 = vmul.f32 %v1027, 0.3275911
    %v1032 = vadd.f32 %v1028, 1.0
    %v1033 = vadd.f32 %v1029, 1.0
    %v1034 = vadd.f32 %v1030, 1.0
    %v1035 = vadd.f32 %v1031, 1.0
    %v1036 = vrcp.pop %v1032
    %v1037 = vmul.f32 1.0, %v1036
    %v1038 = vrcp.pop %v1033
    %v1039 = vmul.f32 1.0, %v1038
    %v1040 = vrcp.pop %v1034
    %v1041 = vmul.f32 1.0, %v1040
    %v1042 = vrcp.pop %v1035
    %v1043 = vmul.f32 1.0, %v1042
    %v1044 = vmul.f32 %v1037, 1.0614054
    %v1045 = vmul.f32 %v1039, 1.0614054
    %v1046 = vmul.f32 %v1041, 1.0614054
    %v1047 = vmul.f32 %v1043, 1.0614054
    %v1048 = vadd.f32 %v1044, -1.4531521
    %v1049 = vadd.f32 %v1045, -1.4531521
    %v1050 = vadd.f32 %v1046, -1.4531521
    %v1051 = vadd.f32 %v1047, -1.4531521
    %v1052 = vmul.f32 %v1048, %v1037
    %v1053 = vmul.f32 %v1049, %v1039
    %v1054 = vmul.f32 %v1050, %v1041
    %v1055 = vmul.f32 %v1051, %v1043
    %v1056 = vadd.f32 %v1052, 1.4214138
    %v1057 = vadd.f32 %v1053, 1.4214138
    %v1058 = vadd.f32 %v1054, 1.4214138
    %v1059 = vadd.f32 %v1055, 1.4214138
    %v1060 = vmul.f32 %v1056, %v1037
    %v1061 = vmul.f32 %v1057, %v1039
    %v1062 = vmul.f32 %v1058, %v1041
    %v1063 = vmul.f32 %v1059, %v1043
    %v1064 = vadd.f32 %v1060, -0.28449672
    %v1065 = vadd.f32 %v1061, -0.28449672
    %v1066 = vadd.f32 %v1062, -0.28449672
    %v1067 = vadd.f32 %v1063, -0.28449672
    %v1068 = vmul.f32 %v1064, %v1037
    %v1069 = vmul.f32 %v1065, %v1039
    %v1070 = vmul.f32 %v1066, %v1041
    %v1071 = vmul.f32 %v1067, %v1043
    %v1072 = vadd.f32 %v1068, 0.2548296
    %v1073 = vadd.f32 %v1069, 0.2548296
    %v1074 = vadd.f32 %v1070, 0.2548296
    %v1075 = vadd.f32 %v1071, 0.2548296
    %v1076 = vmul.f32 %v1072, %v1037
    %v1077 = vmul.f32 %v1073, %v1039
    %v1078 = vmul.f32 %v1074, %v1041
    %v1079 = vmul.f32 %v1075, %v1043
    %v1080 = vsub.f32 0.0, %v1024
    %v1081 = vsub.f32 0.0, %v1025
    %v1082 = vsub.f32 0.0, %v1026
    %v1083 = vsub.f32 0.0, %v1027
    %v1084 = vmul.f32 %v1080, %v1024
    %v1085 = vmul.f32 %v1081, %v1025
    %v1086 = vmul.f32 %v1082, %v1026
    %v1087 = vmul.f32 %v1083, %v1027
    %v1088 = vmul.f32 %v1084, 1.442695
    %v1089 = vpow.pop %v1088
    %v1090 = vmul.f32 %v1085, 1.442695
    %v1091 = vpow.pop %v1090
    %v1092 = vmul.f32 %v1086, 1.442695
    %v1093 = vpow.pop %v1092
    %v1094 = vmul.f32 %v1087, 1.442695
    %v1095 = vpow.pop %v1094
    %v1096 = vmul.f32 %v1076, %v1089
    %v1097 = vmul.f32 %v1077, %v1091
    %v1098 = vmul.f32 %v1078, %v1093
    %v1099 = vmul.f32 %v1079, %v1095
    %v1100 = vsub.f32 1.0, %v1096
    %v1101 = vsub.f32 1.0, %v1097
    %v1102 = vsub.f32 1.0, %v1098
    %v1103 = vsub.f32 1.0, %v1099
    %v1104 = vmul.f32 %v1020, %v1100
    %v1105 = vmul.f32 %v1021, %v1101
    %v1106 = vmul.f32 %v1022, %v1102
    %v1107 = vmul.f32 %v1023, %v1103
    %v1108 = vadd.f32 %v1104, 1.0
    %v1109 = vadd.f32 %v1105, 1.0
    %v1110 = vadd.f32 %v1106, 1.0
    %v1111 = vadd.f32 %v1107, 1.0
    %v1112 = vmul.f32 %v1008, %v1108
    %v1113 = vmul.f32 %v1009, %v1109
    %v1114 = vmul.f32 %v1010, %v1110
    %v1115 = vmul.f32 %v1011, %v1111
    %v1116 = vpack.c.bf16 %v1113, %v1112
    %v1117 = vpack.c.bf16 %v1115, %v1114
    %v1118 = vld [vmem:[%s9] sm:$0xf]
    %v1119 = vld [vmem:[%s9 + $0x4] sm:$0xf]
    %v1120 = vld [vmem:[%s9 + $0x8] sm:$0xf]
    %v1121 = vld [vmem:[%s9 + $0xc] sm:$0xf]
    %v1122 = vld [vmem:[%s9 + $0x10] sm:$0xf]
    %v1123 = vld [vmem:[%s9 + $0x14] sm:$0xf]
    %v1124 = vld [vmem:[%s9 + $0x18] sm:$0xf]
    %v1125 = vld [vmem:[%s9 + $0x1c] sm:$0xf]
    %v1126 = vld [vmem:[%s10] sm:$0x1]
    %v1128 = vlaneseq
    %v1129 = vshrl.u32 %v1128, 7
    %v1130 = vsub.s32 0, %v1129
    %v1131 = vrot.slane %v1126, %v1130
    %v1141 = vunpack.c.l.b16 %v1118
    %v1142 = vunpack.c.l.b16 %v1119
    %v1143 = vunpack.c.l.b16 %v1120
    %v1144 = vunpack.c.l.b16 %v1121
    %v1145 = vunpack.c.l.b16 %v1122
    %v1146 = vunpack.c.l.b16 %v1123
    %v1147 = vunpack.c.l.b16 %v1124
    %v1148 = vunpack.c.l.b16 %v1125
    %v1149 = vpack.c.b16 %v1142, %v1141
    %v1150 = vpack.c.b16 %v1144, %v1143
    %v1151 = vpack.c.b16 %v1146, %v1145
    %v1152 = vpack.c.b16 %v1148, %v1147
    %vm1157 = vcmask 523264
    %v1159 = vsel %vm1157, %v1116, 0
    %v1162 = vsel %vm1157, %v1117, 0
    %1164 = vmatprep.subr.bf16.mxu0 0
    %1165 = vmatpush1.bf16.msra.mxu0 %v1149
    %1166 = vmatprep.subr.bf16.mxu0 0
    %1167 = vmatpush1.bf16.msra.mxu0 %v1150
    %1168 = vmatprep.subr.bf16.mxu0 0
    %1169 = vmatpush1.bf16.msra.mxu0 %v1151
    %1170 = vmatprep.subr.bf16.mxu0 0
    %1171 = vmatpush1.bf16.msra.mxu0 %v1152
    %1172 = vmatprep.subr.bf16.mxu0 0
    %1173 = vmatpush1.bf16.msra.mxu0 0
    %1174 = vmatprep.subr.bf16.mxu0 0
    %1175 = vmatpush1.bf16.msra.mxu0 0
    %1176 = vmatprep.subr.bf16.mxu0 0
    %1177 = vmatpush1.bf16.msra.mxu0 0
    %1178 = vmatprep.subr.bf16.mxu0 0
    %1179 = vmatpush1.bf16.msra.mxu0 0
    %1180 = vmatprep.subr.bf16.mxu0 0
    %1181 = vmatpush1.bf16.msra.mxu0 0
    %1182 = vmatprep.subr.bf16.mxu0 0
    %1183 = vmatpush1.bf16.msra.mxu0 0
    %1184 = vmatprep.subr.bf16.mxu0 0
    %1185 = vmatpush1.bf16.msra.mxu0 0
    %1186 = vmatprep.subr.bf16.mxu0 0
    %1187 = vmatpush1.bf16.msra.mxu0 0
    %1188 = vmatprep.subr.bf16.mxu0 0
    %1189 = vmatpush1.bf16.msra.mxu0 0
    %1190 = vmatprep.subr.bf16.mxu0 0
    %1191 = vmatpush1.bf16.msra.mxu0 0
    %1192 = vmatprep.subr.bf16.mxu0 0
    %1193 = vmatpush1.bf16.msra.mxu0 0
    %1194 = vmatprep.subr.bf16.mxu0 0
    %1195 = vmatpush1.bf16.msra.mxu0 0
    %1196 = vmatprep.mubr.bf16.mxu0 0
    %1197 = vmatmul.mubr.bf16.gmra.mrb[0].mxu0 %v1159
    %v1198 = vpop.f32.mrb[0].mxu0
    %v1199 = vadd.f32 %v1131, %v1198
    %v1200 = vpop.f32.mrb[0].mxu0
    %v1201 = vpop.f32.mrb[0].mxu0
    %v1202 = vadd.f32 %v1131, %v1201
    %v1203 = vpop.f32.mrb[0].mxu0
    %1204 = vmatprep.mubr.bf16.mxu0 0
    %1205 = vmatmul.mubr.bf16.gmra.mrb[0].mxu0 %v1162
    %v1206 = vpop.f32.mrb[0].mxu0
    %v1207 = vadd.f32 %v1131, %v1206
    %v1208 = vpop.f32.mrb[0].mxu0
    %v1209 = vpop.f32.mrb[0].mxu0
    %v1210 = vadd.f32 %v1131, %v1209
    %v1211 = vpop.f32.mrb[0].mxu0
    %1212 = vdwg.mxu0
    %v1213 = vadd.f32 %v924, %v1199
    %v1214 = vadd.f32 %v925, %v1202
    %v1215 = vadd.f32 %v926, %v1207
    %v1216 = vadd.f32 %v927, %v1210
    %v1217 = vld [vmem:[%s11] sm:$0x1]
    %v1218 = vld [vmem:[%s12] sm:$0x1]
    %v1219 = vmul.f32 %v1213, %v1213
    %v1220 = vmul.f32 %v1214, %v1214
    %v1221 = vmul.f32 %v1215, %v1215
    %v1222 = vmul.f32 %v1216, %v1216
    %1227 = vrot.lane.b32.xlu0 %v1219, 32
    %v1228 = vpop.permute.xlu0 %1227
    %1229 = vrot.lane.b32.xlu0 %v1220, 32
    %v1230 = vpop.permute.xlu0 %1229
    %1231 = vrot.lane.b32.xlu0 %v1221, 32
    %v1232 = vpop.permute.xlu0 %1231
    %1233 = vrot.lane.b32.xlu0 %v1222, 32
    %v1234 = vpop.permute.xlu0 %1233
    %v1239 = vsel %vm178, %v1213, %v1228
    %v1240 = vsel %vm178, %v1214, %v1230
    %v1241 = vsel %vm178, %v1215, %v1232
    %v1242 = vsel %vm178, %v1216, %v1234
    %1243 = vmatprep.subr.mxu0 0.0
    %1244 = vmatpush1.msra.mxu0 %v1239
    %1245 = vmatprep.subr.mxu0 0.0
    %1246 = vmatpush1.msra.mxu0 %v1240
    %1247 = vmatprep.subr.mxu0 0.0
    %1248 = vmatpush1.msra.mxu0 %v1241
    %1249 = vmatprep.subr.mxu0 0.0
    %1250 = vmatpush1.msra.mxu0 %v1242
    %1251 = vmatprep.subr.mxu0 0.0
    %1252 = vmatpush1.msra.mxu0 0.0
    %1253 = vmatprep.subr.mxu0 0.0
    %1254 = vmatpush1.msra.mxu0 0.0
    %1255 = vmatprep.subr.mxu0 0.0
    %1256 = vmatpush1.msra.mxu0 0.0
    %1257 = vmatprep.subr.mxu0 0.0
    %1258 = vmatpush1.msra.mxu0 0.0
    %1259 = vmatprep.subr.mxu0 0.0
    %1260 = vmatpush1.msra.mxu0 0.0
    %1261 = vmatprep.subr.mxu0 0.0
    %1262 = vmatpush1.msra.mxu0 0.0
    %1263 = vmatprep.subr.mxu0 0.0
    %1264 = vmatpush1.msra.mxu0 0.0
    %1265 = vmatprep.subr.mxu0 0.0
    %1266 = vmatpush1.msra.mxu0 0.0
    %1267 = vmatprep.subr.mxu0 0.0
    %1268 = vmatpush1.msra.mxu0 0.0
    %1269 = vmatprep.subr.mxu0 0.0
    %1270 = vmatpush1.msra.mxu0 0.0
    %1271 = vmatprep.subr.mxu0 0.0
    %1272 = vmatpush1.msra.mxu0 0.0
    %1273 = vmatprep.subr.mxu0 0.0
    %1274 = vmatpush1.msra.mxu0 0.0
    %1275 = vmatprep.subr.mxu0 0.0
    %1276 = vmatpush1.msra.mxu0 0.0
    %1277 = vmatprep.subr.mxu0 0.0
    %1278 = vmatpush1.msra.mxu0 0.0
    %1279 = vmatprep.subr.mxu0 0.0
    %1280 = vmatpush1.msra.mxu0 0.0
    %1281 = vmatprep.subr.mxu0 0.0
    %1282 = vmatpush1.msra.mxu0 0.0
    %1283 = vmatprep.subr.mxu0 0.0
    %1284 = vmatpush1.msra.mxu0 0.0
    %1285 = vmatprep.subr.mxu0 0.0
    %1286 = vmatpush1.msra.mxu0 0.0
    %1287 = vmatprep.subr.mxu0 0.0
    %1288 = vmatpush1.msra.mxu0 0.0
    %1289 = vmatprep.subr.mxu0 0.0
    %1290 = vmatpush1.msra.mxu0 0.0
    %1291 = vmatprep.subr.mxu0 0.0
    %1292 = vmatpush1.msra.mxu0 0.0
    %1293 = vmatprep.subr.mxu0 0.0
    %1294 = vmatpush1.msra.mxu0 0.0
    %1295 = vmatprep.subr.mxu0 0.0
    %1296 = vmatpush1.msra.mxu0 0.0
    %1297 = vmatprep.subr.mxu0 0.0
    %1298 = vmatpush1.msra.mxu0 0.0
    %1299 = vmatprep.subr.mxu0 0.0
    %1300 = vmatpush1.msra.mxu0 0.0
    %1301 = vmatprep.subr.mxu0 0.0
    %1302 = vmatpush1.msra.mxu0 0.0
    %1303 = vmatprep.subr.mxu0 0.0
    %1304 = vmatpush1.msra.mxu0 0.0
    %1305 = vmatprep.subr.mxu0 0.0
    %1306 = vmatpush1.msra.mxu0 0.0
    %1307 = vmatprep.mubr.f32.mxu0 0.0
    %1308 = vmatmul.mubr.f32.gmra.mrb[0].mxu0 %v806
    %v1309 = vpop.f32.mrb[0].mxu0
    %v1310 = vadd.f32 0.0, %v1309
    %v1311 = vpop.f32.mrb[0].mxu0
    %1312 = vdwg.mxu0
    %v1313 = vmul.f32 %v1310, 0.03125
    %v1314 = vmul.f32 %v1313, %v1313
    %1316 = vrot.lane.b32.xlu0 %v1314, 32
    %v1317 = vpop.permute.xlu0 %1316
    %v1319 = vsub.f32 %v1313, %v1317
    %v1320 = vadd.f32 %v1319, 1e-05
    %v1321 = vrsqrt.pop %v1320
    %v1324 = vunpack.c.l.s4 1966171168
    %v1325 = vunpack.c.0.s8 %v1324
    %v1326 = vlaneseq
    %v1327 = vshrl.u32 %v1326, 7
    %v1328 = vsub.s32 %v1325, %v1327
    %v1329 = vrot.slane %v1321, %v1328
    %v1331 = vunpack.c.l.s4 1966171168
    %v1332 = vunpack.c.0.s8 %v1331
    %v1333 = vlaneseq
    %v1334 = vshrl.u32 %v1333, 7
    %v1335 = vsub.s32 %v1332, %v1334
    %v1336 = vrot.slane %v1329, %v1335
    %1337 = vrot.lane.b32.xlu0 %v1336, 96
    %v1338 = vpop.permute.xlu0 %1337
    %v1340 = vmul.f32 %v1217, %v1338
    %v1342 = vlaneseq
    %v1343 = vshrl.u32 %v1342, 7
    %v1344 = vsub.s32 0, %v1343
    %v1345 = vrot.slane %v1340, %v1344
    %v1347 = vmul.f32 %v1213, %v1345
    %v1348 = vmul.f32 %v1214, %v1345
    %v1349 = vmul.f32 %v1215, %v1345
    %v1350 = vmul.f32 %v1216, %v1345
    %v1351 = vmul.f32 %v1313, %v1340
    %v1352 = vsub.f32 %v1218, %v1351
    %v1354 = vlaneseq
    %v1355 = vshrl.u32 %v1354, 7
    %v1356 = vsub.s32 0, %v1355
    %v1357 = vrot.slane %v1352, %v1356
    %v1359 = vadd.f32 %v1347, %v1357
    %v1360 = vadd.f32 %v1348, %v1357
    %v1361 = vadd.f32 %v1349, %v1357
    %v1362 = vadd.f32 %v1350, %v1357
    %v1363 = vpack.c.bf16 %v1360, %v1359
    %v1364 = vpack.c.bf16 %v1362, %v1361
    %s1365 = scalar_lea.vmem %s1, 16
    %v1366 = vld [vmem:[%s1365] sm:$0xf]
    %v1367 = vld [vmem:[%s1365 + $0x4] sm:$0xf]
    %v1368 = vld [vmem:[%s1365 + $0x8] sm:$0xf]
    %v1369 = vld [vmem:[%s1365 + $0xc] sm:$0xf]
    %s1370 = scalar_lea.vmem %s2, 1
    %v1371 = vld [vmem:[%s1370] sm:$0x1]
    %v1373 = vlaneseq
    %v1374 = vshrl.u32 %v1373, 7
    %v1375 = vsub.s32 0, %v1374
    %v1376 = vrot.slane %v1371, %v1375
    %v1382 = vunpack.c.l.b16 %v1366
    %v1383 = vunpack.c.l.b16 %v1367
    %v1384 = vunpack.c.l.b16 %v1368
    %v1385 = vunpack.c.l.b16 %v1369
    %v1386 = vpack.c.b16 %v1383, %v1382
    %v1387 = vpack.c.b16 %v1385, %v1384
    %v1391 = vsel %vm178, %v1363, 0
    %v1394 = vsel %vm178, %v1364, 0
    %1396 = vmatprep.subr.bf16.mxu0 0
    %1397 = vmatpush1.bf16.msra.mxu0 %v1386
    %1398 = vmatprep.subr.bf16.mxu0 0
    %1399 = vmatpush1.bf16.msra.mxu0 %v1387
    %1400 = vmatprep.subr.bf16.mxu0 0
    %1401 = vmatpush1.bf16.msra.mxu0 0
    %1402 = vmatprep.subr.bf16.mxu0 0
    %1403 = vmatpush1.bf16.msra.mxu0 0
    %1404 = vmatprep.subr.bf16.mxu0 0
    %1405 = vmatpush1.bf16.msra.mxu0 0
    %1406 = vmatprep.subr.bf16.mxu0 0
    %1407 = vmatpush1.bf16.msra.mxu0 0
    %1408 = vmatprep.subr.bf16.mxu0 0
    %1409 = vmatpush1.bf16.msra.mxu0 0
    %1410 = vmatprep.subr.bf16.mxu0 0
    %1411 = vmatpush1.bf16.msra.mxu0 0
    %1412 = vmatprep.subr.bf16.mxu0 0
    %1413 = vmatpush1.bf16.msra.mxu0 0
    %1414 = vmatprep.subr.bf16.mxu0 0
    %1415 = vmatpush1.bf16.msra.mxu0 0
    %1416 = vmatprep.subr.bf16.mxu0 0
    %1417 = vmatpush1.bf16.msra.mxu0 0
    %1418 = vmatprep.subr.bf16.mxu0 0
    %1419 = vmatpush1.bf16.msra.mxu0 0
    %1420 = vmatprep.subr.bf16.mxu0 0
    %1421 = vmatpush1.bf16.msra.mxu0 0
    %1422 = vmatprep.subr.bf16.mxu0 0
    %1423 = vmatpush1.bf16.msra.mxu0 0
    %1424 = vmatprep.subr.bf16.mxu0 0
    %1425 = vmatpush1.bf16.msra.mxu0 0
    %1426 = vmatprep.subr.bf16.mxu0 0
    %1427 = vmatpush1.bf16.msra.mxu0 0
    %1428 = vmatprep.mubr.bf16.mxu0 0
    %1429 = vmatmul.mubr.bf16.gmra.mrb[0].mxu0 %v1391
    %v1430 = vpop.f32.mrb[0].mxu0
    %v1431 = vadd.f32 %v1376, %v1430
    %v1432 = vpop.f32.mrb[0].mxu0
    %v1433 = vpop.f32.mrb[0].mxu0
    %v1434 = vadd.f32 %v1376, %v1433
    %v1435 = vpop.f32.mrb[0].mxu0
    %1436 = vmatprep.mubr.bf16.mxu0 0
    %1437 = vmatmul.mubr.bf16.gmra.mrb[0].mxu0 %v1394
    %v1438 = vpop.f32.mrb[0].mxu0
    %v1439 = vadd.f32 %v1376, %v1438
    %v1440 = vpop.f32.mrb[0].mxu0
    %v1441 = vpop.f32.mrb[0].mxu0
    %v1442 = vadd.f32 %v1376, %v1441
    %v1443 = vpop.f32.mrb[0].mxu0
    %1444 = vdwg.mxu0
    %v1445 = vmul.f32 %v1431, %v251
    %v1446 = vmul.f32 %v1434, %v253
    %v1447 = vmul.f32 %v1439, %v255
    %v1448 = vmul.f32 %v1442, %v257
    %v1449 = vmul.f32 %v1431, %v259
    %v1450 = vmul.f32 %v1434, %v261
    %v1451 = vmul.f32 %v1439, %v263
    %v1452 = vmul.f32 %v1442, %v265
    %v1453 = vmul.f32 %v1431, %v267
    %v1454 = vmul.f32 %v1434, %v269
    %v1455 = vmul.f32 %v1439, %v271
    %v1456 = vmul.f32 %v1442, %v273
    %v1457 = vmul.f32 %v1431, %v275
    %v1458 = vmul.f32 %v1434, %v277
    %v1459 = vmul.f32 %v1439, %v279
    %v1460 = vmul.f32 %v1442, %v281
    %v1461 = vmul.f32 %v1431, %v315
    %v1462 = vmul.f32 %v1434, %v317
    %v1463 = vmul.f32 %v1439, %v319
    %v1464 = vmul.f32 %v1442, %v321
    %v1465 = vmul.f32 %v1431, %v323
    %v1466 = vmul.f32 %v1434, %v325
    %v1467 = vmul.f32 %v1439, %v327
    %v1468 = vmul.f32 %v1442, %v329
    %v1469 = vmul.f32 %v1431, %v331
    %v1470 = vmul.f32 %v1434, %v333
    %v1471 = vmul.f32 %v1439, %v335
    %v1472 = vmul.f32 %v1442, %v337
    %v1473 = vmul.f32 %v1431, %v339
    %v1474 = vmul.f32 %v1434, %v341
    %v1475 = vmul.f32 %v1439, %v343
    %v1476 = vmul.f32 %v1442, %v345
    %v1477 = vpack.c.bf16 %v1434, %v1431
    %v1478 = vpack.c.bf16 %v1442, %v1439
    %v1479 = vpack.c.bf16 %v1446, %v1445
    %v1480 = vpack.c.bf16 %v1448, %v1447
    %v1481 = vpack.c.bf16 %v1450, %v1449
    %v1482 = vpack.c.bf16 %v1452, %v1451
    %v1483 = vpack.c.bf16 %v1454, %v1453
    %v1484 = vpack.c.bf16 %v1456, %v1455
    %v1485 = vpack.c.bf16 %v1458, %v1457
    %v1486 = vpack.c.bf16 %v1460, %v1459
    %1495 = vrot.lane.b32.xlu0 %v1479, 96
    %v1496 = vpop.permute.xlu0 %1495
    %1497 = vrot.lane.b32.xlu0 %v1480, 96
    %v1498 = vpop.permute.xlu0 %1497
    %1499 = vrot.lane.b32.xlu0 %v1481, 96
    %v1500 = vpop.permute.xlu0 %1499
    %1501 = vrot.lane.b32.xlu0 %v1482, 96
    %v1502 = vpop.permute.xlu0 %1501
    %1503 = vrot.lane.b32.xlu0 %v1483, 96
    %v1504 = vpop.permute.xlu0 %1503
    %1505 = vrot.lane.b32.xlu0 %v1484, 96
    %v1506 = vpop.permute.xlu0 %1505
    %1507 = vrot.lane.b32.xlu0 %v1485, 96
    %v1508 = vpop.permute.xlu0 %1507
    %1509 = vrot.lane.b32.xlu0 %v1486, 96
    %v1510 = vpop.permute.xlu0 %1509
    %v1512 = vsel %vm178, %v1477, 0
    %v1515 = vsel %vm178, %v1478, 0
    %v1518 = vsel %vm178, %v1496, 0
    %v1521 = vsel %vm178, %v1498, 0
    %v1524 = vsel %vm178, %v1500, 0
    %v1527 = vsel %vm178, %v1502, 0
    %v1530 = vsel %vm178, %v1504, 0
    %v1533 = vsel %vm178, %v1506, 0
    %v1536 = vsel %vm178, %v1508, 0
    %v1539 = vsel %vm178, %v1510, 0
    %1541 = vmatprep.subr.bf16.mxu0 0
    %1542 = vmatpush1.bf16.xpose.msra.mxu0 %v1518
    %1543 = vmatprep.subr.bf16.mxu0 0
    %1544 = vmatpush1.bf16.xpose.msra.mxu0 %v1521
    %1545 = vmatprep.subr.bf16.mxu0 0
    %1546 = vmatpush1.bf16.xpose.msra.mxu0 %v1524
    %1547 = vmatprep.subr.bf16.mxu0 0
    %1548 = vmatpush1.bf16.xpose.msra.mxu0 %v1527
    %1549 = vmatprep.subr.bf16.mxu0 0
    %1550 = vmatpush1.bf16.xpose.msra.mxu0 %v1530
    %1551 = vmatprep.subr.bf16.mxu0 0
    %1552 = vmatpush1.bf16.xpose.msra.mxu0 %v1533
    %1553 = vmatprep.subr.bf16.mxu0 0
    %1554 = vmatpush1.bf16.xpose.msra.mxu0 %v1536
    %1555 = vmatprep.subr.bf16.mxu0 0
    %1556 = vmatpush1.bf16.xpose.msra.mxu0 %v1539
    %1557 = vmatprep.subr.bf16.mxu0 0
    %1558 = vmatpush1.bf16.xpose.msra.mxu0 0
    %1559 = vmatprep.subr.bf16.mxu0 0
    %1560 = vmatpush1.bf16.xpose.msra.mxu0 0
    %1561 = vmatprep.subr.bf16.mxu0 0
    %1562 = vmatpush1.bf16.xpose.msra.mxu0 0
    %1563 = vmatprep.subr.bf16.mxu0 0
    %1564 = vmatpush1.bf16.xpose.msra.mxu0 0
    %1565 = vmatprep.subr.bf16.mxu0 0
    %1566 = vmatpush1.bf16.xpose.msra.mxu0 0
    %1567 = vmatprep.subr.bf16.mxu0 0
    %1568 = vmatpush1.bf16.xpose.msra.mxu0 0
    %1569 = vmatprep.subr.bf16.mxu0 0
    %1570 = vmatpush1.bf16.xpose.msra.mxu0 0
    %1571 = vmatprep.subr.bf16.mxu0 0
    %1572 = vmatpush1.bf16.xpose.msra.mxu0 0
    %1573 = vmatprep.mubr.bf16.mxu0 0
    %1574 = vmatmul.mubr.bf16.gmra.mrb[0].mxu0 %v1512
    %v1575 = vpop.f32.mrb[0].mxu0
    %v1576 = vadd.f32 %v116, %v1575
    %v1577 = vpop.f32.mrb[0].mxu0
    %v1578 = vpop.f32.mrb[0].mxu0
    %v1579 = vadd.f32 %v117, %v1578
    %v1580 = vpop.f32.mrb[0].mxu0
    %1581 = vmatprep.mubr.bf16.mxu0 0
    %1582 = vmatmul.mubr.bf16.gmra.mrb[0].mxu0 %v1515
    %v1583 = vpop.f32.mrb[0].mxu0
    %v1584 = vadd.f32 %v118, %v1583
    %v1585 = vpop.f32.mrb[0].mxu0
    %v1586 = vpop.f32.mrb[0].mxu0
    %v1587 = vadd.f32 %v119, %v1586
    %v1588 = vpop.f32.mrb[0].mxu0
    %1589 = vdwg.mxu0
    %1590 = vmax.xlane.f32.xlu0 %v1576
    %v1591 = vpop.xlane.xlu0 %1590
    %1592 = vmax.xlane.f32.xlu0 %v1579
    %v1593 = vpop.xlane.xlu0 %1592
    %1594 = vmax.xlane.f32.xlu0 %v1584
    %v1595 = vpop.xlane.xlu0 %1594
    %1596 = vmax.xlane.f32.xlu0 %v1587
    %v1597 = vpop.xlane.xlu0 %1596
    %v1598 = vsub.f32 %v1576, %v1591
    %v1599 = vsub.f32 %v1579, %v1593
    %v1600 = vsub.f32 %v1584, %v1595
    %v1601 = vsub.f32 %v1587, %v1597
    %v1602 = vmul.f32 %v1598, 1.442695
    %v1603 = vpow.pop %v1602
    %v1604 = vmul.f32 %v1599, 1.442695
    %v1605 = vpow.pop %v1604
    %v1606 = vmul.f32 %v1600, 1.442695
    %v1607 = vpow.pop %v1606
    %v1608 = vmul.f32 %v1601, 1.442695
    %v1609 = vpow.pop %v1608
    %1610 = vmatprep.subr.mxu0 0.0
    %1611 = vmatpush1.msra.mxu0 %v136
    %1612 = vmatprep.subr.mxu0 0.0
    %1613 = vmatpush1.msra.mxu0 %v137
    %1614 = vmatprep.subr.mxu0 0.0
    %1615 = vmatpush1.msra.mxu0 %v138
    %1616 = vmatprep.subr.mxu0 0.0
    %1617 = vmatpush1.msra.mxu0 %v139
    %1618 = vmatprep.subr.mxu0 0.0
    %1619 = vmatpush1.msra.mxu0 %v140
    %1620 = vmatprep.subr.mxu0 0.0
    %1621 = vmatpush1.msra.mxu0 %v141
    %1622 = vmatprep.subr.mxu0 0.0
    %1623 = vmatpush1.msra.mxu0 %v142
    %1624 = vmatprep.subr.mxu0 0.0
    %1625 = vmatpush1.msra.mxu0 %v143
    %1626 = vmatprep.subr.mxu0 0.0
    %1627 = vmatpush1.msra.mxu0 %v144
    %1628 = vmatprep.subr.mxu0 0.0
    %1629 = vmatpush1.msra.mxu0 %v145
    %1630 = vmatprep.subr.mxu0 0.0
    %1631 = vmatpush1.msra.mxu0 %v146
    %1632 = vmatprep.subr.mxu0 0.0
    %1633 = vmatpush1.msra.mxu0 %v147
    %1634 = vmatprep.subr.mxu0 0.0
    %1635 = vmatpush1.msra.mxu0 %v148
    %1636 = vmatprep.subr.mxu0 0.0
    %1637 = vmatpush1.msra.mxu0 %v149
    %1638 = vmatprep.subr.mxu0 0.0
    %1639 = vmatpush1.msra.mxu0 %v150
    %1640 = vmatprep.subr.mxu0 0.0
    %1641 = vmatpush1.msra.mxu0 %v151
    %1642 = vmatprep.subr.mxu0 0.0
    %1643 = vmatpush1.msra.mxu0 0.0
    %1644 = vmatprep.subr.mxu0 0.0
    %1645 = vmatpush1.msra.mxu0 0.0
    %1646 = vmatprep.subr.mxu0 0.0
    %1647 = vmatpush1.msra.mxu0 0.0
    %1648 = vmatprep.subr.mxu0 0.0
    %1649 = vmatpush1.msra.mxu0 0.0
    %1650 = vmatprep.subr.mxu0 0.0
    %1651 = vmatpush1.msra.mxu0 0.0
    %1652 = vmatprep.subr.mxu0 0.0
    %1653 = vmatpush1.msra.mxu0 0.0
    %1654 = vmatprep.subr.mxu0 0.0
    %1655 = vmatpush1.msra.mxu0 0.0
    %1656 = vmatprep.subr.mxu0 0.0
    %1657 = vmatpush1.msra.mxu0 0.0
    %1658 = vmatprep.subr.mxu0 0.0
    %1659 = vmatpush1.msra.mxu0 0.0
    %1660 = vmatprep.subr.mxu0 0.0
    %1661 = vmatpush1.msra.mxu0 0.0
    %1662 = vmatprep.subr.mxu0 0.0
    %1663 = vmatpush1.msra.mxu0 0.0
    %1664 = vmatprep.subr.mxu0 0.0
    %1665 = vmatpush1.msra.mxu0 0.0
    %1666 = vmatprep.subr.mxu0 0.0
    %1667 = vmatpush1.msra.mxu0 0.0
    %1668 = vmatprep.subr.mxu0 0.0
    %1669 = vmatpush1.msra.mxu0 0.0
    %1670 = vmatprep.subr.mxu0 0.0
    %1671 = vmatpush1.msra.mxu0 0.0
    %1672 = vmatprep.subr.mxu0 0.0
    %1673 = vmatpush1.msra.mxu0 0.0
    %1674 = vmatprep.mubr.f32.mxu0 0.0
    %1675 = vmatmul.mubr.f32.gmra.mrb[0].mxu0 %v1603
    %v1676 = vpop.f32.mrb[0].mxu0
    %v1677 = vadd.f32 0.0, %v1676
    %v1678 = vpop.f32.mrb[0].mxu0
    %1679 = vmatprep.mubr.f32.mxu0 0.0
    %1680 = vmatmul.mubr.f32.gmra.mrb[0].mxu0 %v1605
    %v1681 = vpop.f32.mrb[0].mxu0
    %v1682 = vadd.f32 0.0, %v1681
    %v1683 = vpop.f32.mrb[0].mxu0
    %1684 = vmatprep.mubr.f32.mxu0 0.0
    %1685 = vmatmul.mubr.f32.gmra.mrb[0].mxu0 %v1607
    %v1686 = vpop.f32.mrb[0].mxu0
    %v1687 = vadd.f32 0.0, %v1686
    %v1688 = vpop.f32.mrb[0].mxu0
    %1689 = vmatprep.mubr.f32.mxu0 0.0
    %1690 = vmatmul.mubr.f32.gmra.mrb[0].mxu0 %v1609
    %v1691 = vpop.f32.mrb[0].mxu0
    %v1692 = vadd.f32 0.0, %v1691
    %v1693 = vpop.f32.mrb[0].mxu0
    %1694 = vdwg.mxu0
    %v1695 = vrcp.pop %v1677
    %v1696 = vrcp.pop %v1682
    %v1697 = vrcp.pop %v1687
    %v1698 = vrcp.pop %v1692
    %v1699 = vmul.f32 %v1603, %v1695
    %v1700 = vmul.f32 %v1605, %v1696
    %v1701 = vmul.f32 %v1607, %v1697
    %v1702 = vmul.f32 %v1609, %v1698
    %v1703 = vpack.c.bf16 %v1700, %v1699
    %v1704 = vpack.c.bf16 %v1702, %v1701
    %v1705 = vpack.c.bf16 %v1462, %v1461
    %v1706 = vpack.c.bf16 %v1464, %v1463
    %v1707 = vpack.c.bf16 %v1466, %v1465
    %v1708 = vpack.c.bf16 %v1468, %v1467
    %v1709 = vpack.c.bf16 %v1470, %v1469
    %v1710 = vpack.c.bf16 %v1472, %v1471
    %v1711 = vpack.c.bf16 %v1474, %v1473
    %v1712 = vpack.c.bf16 %v1476, %v1475
    %1721 = vrot.lane.b32.xlu0 %v1705, 64
    %v1722 = vpop.permute.xlu0 %1721
    %1723 = vrot.lane.b32.xlu0 %v1706, 64
    %v1724 = vpop.permute.xlu0 %1723
    %1725 = vrot.lane.b32.xlu0 %v1707, 64
    %v1726 = vpop.permute.xlu0 %1725
    %1727 = vrot.lane.b32.xlu0 %v1708, 64
    %v1728 = vpop.permute.xlu0 %1727
    %1729 = vrot.lane.b32.xlu0 %v1709, 64
    %v1730 = vpop.permute.xlu0 %1729
    %1731 = vrot.lane.b32.xlu0 %v1710, 64
    %v1732 = vpop.permute.xlu0 %1731
    %1733 = vrot.lane.b32.xlu0 %v1711, 64
    %v1734 = vpop.permute.xlu0 %1733
    %1735 = vrot.lane.b32.xlu0 %v1712, 64
    %v1736 = vpop.permute.xlu0 %1735
    %1745 = vmatprep.subr.bf16.mxu0 0
    %1746 = vmatpush1.bf16.msra.mxu0 %v1722
    %1747 = vmatprep.subr.bf16.mxu0 0
    %1748 = vmatpush1.bf16.msra.mxu0 %v1724
    %1749 = vmatprep.subr.bf16.mxu0 0
    %1750 = vmatpush1.bf16.msra.mxu0 %v1726
    %1751 = vmatprep.subr.bf16.mxu0 0
    %1752 = vmatpush1.bf16.msra.mxu0 %v1728
    %1753 = vmatprep.subr.bf16.mxu0 0
    %1754 = vmatpush1.bf16.msra.mxu0 %v1730
    %1755 = vmatprep.subr.bf16.mxu0 0
    %1756 = vmatpush1.bf16.msra.mxu0 %v1732
    %1757 = vmatprep.subr.bf16.mxu0 0
    %1758 = vmatpush1.bf16.msra.mxu0 %v1734
    %1759 = vmatprep.subr.bf16.mxu0 0
    %1760 = vmatpush1.bf16.msra.mxu0 %v1736
    %1761 = vmatprep.subr.bf16.mxu0 0
    %1762 = vmatpush1.bf16.msra.mxu0 0
    %1763 = vmatprep.subr.bf16.mxu0 0
    %1764 = vmatpush1.bf16.msra.mxu0 0
    %1765 = vmatprep.subr.bf16.mxu0 0
    %1766 = vmatpush1.bf16.msra.mxu0 0
    %1767 = vmatprep.subr.bf16.mxu0 0
    %1768 = vmatpush1.bf16.msra.mxu0 0
    %1769 = vmatprep.subr.bf16.mxu0 0
    %1770 = vmatpush1.bf16.msra.mxu0 0
    %1771 = vmatprep.subr.bf16.mxu0 0
    %1772 = vmatpush1.bf16.msra.mxu0 0
    %1773 = vmatprep.subr.bf16.mxu0 0
    %1774 = vmatpush1.bf16.msra.mxu0 0
    %1775 = vmatprep.subr.bf16.mxu0 0
    %1776 = vmatpush1.bf16.msra.mxu0 0
    %1777 = vmatprep.mubr.bf16.mxu0 0
    %1778 = vmatmul.mubr.bf16.gmra.mrb[0].mxu0 %v1703
    %v1779 = vpop.f32.mrb[0].mxu0
    %v1780 = vadd.f32 0.0, %v1779
    %v1781 = vpop.f32.mrb[0].mxu0
    %v1782 = vpop.f32.mrb[0].mxu0
    %v1783 = vadd.f32 0.0, %v1782
    %v1784 = vpop.f32.mrb[0].mxu0
    %1785 = vmatprep.mubr.bf16.mxu0 0
    %1786 = vmatmul.mubr.bf16.gmra.mrb[0].mxu0 %v1704
    %v1787 = vpop.f32.mrb[0].mxu0
    %v1788 = vadd.f32 0.0, %v1787
    %v1789 = vpop.f32.mrb[0].mxu0
    %v1790 = vpop.f32.mrb[0].mxu0
    %v1791 = vadd.f32 0.0, %v1790
    %v1792 = vpop.f32.mrb[0].mxu0
    %1793 = vdwg.mxu0
    %v1794 = vpack.c.bf16 %v1783, %v1780
    %v1795 = vpack.c.bf16 %v1791, %v1788
    %s1796 = scalar_lea.vmem %s3, 16
    %v1797 = vld [vmem:[%s1796] sm:$0xf]
    %v1798 = vld [vmem:[%s1796 + $0x4] sm:$0xf]
    %v1799 = vld [vmem:[%s1796 + $0x8] sm:$0xf]
    %v1800 = vld [vmem:[%s1796 + $0xc] sm:$0xf]
    %s1801 = scalar_lea.vmem [#allocation2], 1
    %v1802 = vld [vmem:[%s1801] sm:$0x1]
    %v1804 = vlaneseq
    %v1805 = vshrl.u32 %v1804, 7
    %v1806 = vsub.s32 0, %v1805
    %v1807 = vrot.slane %v1802, %v1806
    %v1813 = vunpack.c.l.b16 %v1797
    %v1814 = vunpack.c.l.b16 %v1798
    %v1815 = vunpack.c.l.b16 %v1799
    %v1816 = vunpack.c.l.b16 %v1800
    %v1817 = vpack.c.b16 %v1814, %v1813
    %v1818 = vpack.c.b16 %v1816, %v1815
    %v1822 = vsel %vm178, %v1794, 0
    %v1825 = vsel %vm178, %v1795, 0
    %1827 = vmatprep.subr.bf16.mxu0 0
    %1828 = vmatpush1.bf16.msra.mxu0 %v1817
    %1829 = vmatprep.subr.bf16.mxu0 0
    %1830 = vmatpush1.bf16.msra.mxu0 %v1818
    %1831 = vmatprep.subr.bf16.mxu0 0
    %1832 = vmatpush1.bf16.msra.mxu0 0
    %1833 = vmatprep.subr.bf16.mxu0 0
    %1834 = vmatpush1.bf16.msra.mxu0 0
    %1835 = vmatprep.subr.bf16.mxu0 0
    %1836 = vmatpush1.bf16.msra.mxu0 0
    %1837 = vmatprep.subr.bf16.mxu0 0
    %1838 = vmatpush1.bf16.msra.mxu0 0
    %1839 = vmatprep.subr.bf16.mxu0 0
    %1840 = vmatpush1.bf16.msra.mxu0 0
    %1841 = vmatprep.subr.bf16.mxu0 0
    %1842 = vmatpush1.bf16.msra.mxu0 0
    %1843 = vmatprep.subr.bf16.mxu0 0
    %1844 = vmatpush1.bf16.msra.mxu0 0
    %1845 = vmatprep.subr.bf16.mxu0 0
    %1846 = vmatpush1.bf16.msra.mxu0 0
    %1847 = vmatprep.subr.bf16.mxu0 0
    %1848 = vmatpush1.bf16.msra.mxu0 0
    %1849 = vmatprep.subr.bf16.mxu0 0
    %1850 = vmatpush1.bf16.msra.mxu0 0
    %1851 = vmatprep.subr.bf16.mxu0 0
    %1852 = vmatpush1.bf16.msra.mxu0 0
    %1853 = vmatprep.subr.bf16.mxu0 0
    %1854 = vmatpush1.bf16.msra.mxu0 0
    %1855 = vmatprep.subr.bf16.mxu0 0
    %1856 = vmatpush1.bf16.msra.mxu0 0
    %1857 = vmatprep.subr.bf16.mxu0 0
    %1858 = vmatpush1.bf16.msra.mxu0 0
    %1859 = vmatprep.mubr.bf16.mxu0 0
    %1860 = vmatmul.mubr.bf16.gmra.mrb[0].mxu0 %v1822
    %v1861 = vpop.f32.mrb[0].mxu0
    %v1862 = vadd.f32 %v1807, %v1861
    %v1863 = vpop.f32.mrb[0].mxu0
    %v1864 = vpop.f32.mrb[0].mxu0
    %v1865 = vadd.f32 %v1807, %v1864
    %v1866 = vpop.f32.mrb[0].mxu0
    %1867 = vmatprep.mubr.bf16.mxu0 0
    %1868 = vmatmul.mubr.bf16.gmra.mrb[0].mxu0 %v1825
    %v1869 = vpop.f32.mrb[0].mxu0
    %v1870 = vadd.f32 %v1807, %v1869
    %v1871 = vpop.f32.mrb[0].mxu0
    %v1872 = vpop.f32.mrb[0].mxu0
    %v1873 = vadd.f32 %v1807, %v1872
    %v1874 = vpop.f32.mrb[0].mxu0
    %1875 = vdwg.mxu0
    %v1876 = vadd.f32 %v1359, %v1862
    %v1877 = vadd.f32 %v1360, %v1865
    %v1878 = vadd.f32 %v1361, %v1870
    %v1879 = vadd.f32 %v1362, %v1873
    %s1880 = scalar_lea.vmem [#allocation4], 1
    %v1881 = vld [vmem:[%s1880] sm:$0x1]
    %s1882 = scalar_lea.vmem [#allocation6], 1
    %v1883 = vld [vmem:[%s1882] sm:$0x1]
    %v1884 = vmul.f32 %v1876, %v1876
    %v1885 = vmul.f32 %v1877, %v1877
    %v1886 = vmul.f32 %v1878, %v1878
    %v1887 = vmul.f32 %v1879, %v1879
    %1892 = vrot.lane.b32.xlu0 %v1884, 32
    %v1893 = vpop.permute.xlu0 %1892
    %1894 = vrot.lane.b32.xlu0 %v1885, 32
    %v1895 = vpop.permute.xlu0 %1894
    %1896 = vrot.lane.b32.xlu0 %v1886, 32
    %v1897 = vpop.permute.xlu0 %1896
    %1898 = vrot.lane.b32.xlu0 %v1887, 32
    %v1899 = vpop.permute.xlu0 %1898
    %v1904 = vsel %vm178, %v1876, %v1893
    %v1905 = vsel %vm178, %v1877, %v1895
    %v1906 = vsel %vm178, %v1878, %v1897
    %v1907 = vsel %vm178, %v1879, %v1899
    %1908 = vmatprep.subr.mxu0 0.0
    %1909 = vmatpush1.msra.mxu0 %v1904
    %1910 = vmatprep.subr.mxu0 0.0
    %1911 = vmatpush1.msra.mxu0 %v1905
    %1912 = vmatprep.subr.mxu0 0.0
    %1913 = vmatpush1.msra.mxu0 %v1906
    %1914 = vmatprep.subr.mxu0 0.0
    %1915 = vmatpush1.msra.mxu0 %v1907
    %1916 = vmatprep.subr.mxu0 0.0
    %1917 = vmatpush1.msra.mxu0 0.0
    %1918 = vmatprep.subr.mxu0 0.0
    %1919 = vmatpush1.msra.mxu0 0.0
    %1920 = vmatprep.subr.mxu0 0.0
    %1921 = vmatpush1.msra.mxu0 0.0
    %1922 = vmatprep.subr.mxu0 0.0
    %1923 = vmatpush1.msra.mxu0 0.0
    %1924 = vmatprep.subr.mxu0 0.0
    %1925 = vmatpush1.msra.mxu0 0.0
    %1926 = vmatprep.subr.mxu0 0.0
    %1927 = vmatpush1.msra.mxu0 0.0
    %1928 = vmatprep.subr.mxu0 0.0
    %1929 = vmatpush1.msra.mxu0 0.0
    %1930 = vmatprep.subr.mxu0 0.0
    %1931 = vmatpush1.msra.mxu0 0.0
    %1932 = vmatprep.subr.mxu0 0.0
    %1933 = vmatpush1.msra.mxu0 0.0
    %1934 = vmatprep.subr.mxu0 0.0
    %1935 = vmatpush1.msra.mxu0 0.0
    %1936 = vmatprep.subr.mxu0 0.0
    %1937 = vmatpush1.msra.mxu0 0.0
    %1938 = vmatprep.subr.mxu0 0.0
    %1939 = vmatpush1.msra.mxu0 0.0
    %1940 = vmatprep.subr.mxu0 0.0
    %1941 = vmatpush1.msra.mxu0 0.0
    %1942 = vmatprep.subr.mxu0 0.0
    %1943 = vmatpush1.msra.mxu0 0.0
    %1944 = vmatprep.subr.mxu0 0.0
    %1945 = vmatpush1.msra.mxu0 0.0
    %1946 = vmatprep.subr.mxu0 0.0
    %1947 = vmatpush1.msra.mxu0 0.0
    %1948 = vmatprep.subr.mxu0 0.0
    %1949 = vmatpush1.msra.mxu0 0.0
    %1950 = vmatprep.subr.mxu0 0.0
    %1951 = vmatpush1.msra.mxu0 0.0
    %1952 = vmatprep.subr.mxu0 0.0
    %1953 = vmatpush1.msra.mxu0 0.0
    %1954 = vmatprep.subr.mxu0 0.0
    %1955 = vmatpush1.msra.mxu0 0.0
    %1956 = vmatprep.subr.mxu0 0.0
    %1957 = vmatpush1.msra.mxu0 0.0
    %1958 = vmatprep.subr.mxu0 0.0
    %1959 = vmatpush1.msra.mxu0 0.0
    %1960 = vmatprep.subr.mxu0 0.0
    %1961 = vmatpush1.msra.mxu0 0.0
    %1962 = vmatprep.subr.mxu0 0.0
    %1963 = vmatpush1.msra.mxu0 0.0
    %1964 = vmatprep.subr.mxu0 0.0
    %1965 = vmatpush1.msra.mxu0 0.0
    %1966 = vmatprep.subr.mxu0 0.0
    %1967 = vmatpush1.msra.mxu0 0.0
    %1968 = vmatprep.subr.mxu0 0.0
    %1969 = vmatpush1.msra.mxu0 0.0
    %1970 = vmatprep.subr.mxu0 0.0
    %1971 = vmatpush1.msra.mxu0 0.0
    %1972 = vmatprep.mubr.f32.mxu0 0.0
    %1973 = vmatmul.mubr.f32.gmra.mrb[0].mxu0 %v806
    %v1974 = vpop.f32.mrb[0].mxu0
    %v1975 = vadd.f32 0.0, %v1974
    %v1976 = vpop.f32.mrb[0].mxu0
    %1977 = vdwg.mxu0
    %v1978 = vmul.f32 %v1975, 0.03125
    %v1979 = vmul.f32 %v1978, %v1978
    %1981 = vrot.lane.b32.xlu0 %v1979, 32
    %v1982 = vpop.permute.xlu0 %1981
    %v1984 = vsub.f32 %v1978, %v1982
    %v1985 = vadd.f32 %v1984, 1e-05
    %v1986 = vrsqrt.pop %v1985
    %v1989 = vunpack.c.l.s4 1966171168
    %v1990 = vunpack.c.0.s8 %v1989
    %v1991 = vlaneseq
    %v1992 = vshrl.u32 %v1991, 7
    %v1993 = vsub.s32 %v1990, %v1992
    %v1994 = vrot.slane %v1986, %v1993
    %v1996 = vunpack.c.l.s4 1966171168
    %v1997 = vunpack.c.0.s8 %v1996
    %v1998 = vlaneseq
    %v1999 = vshrl.u32 %v1998, 7
    %v2000 = vsub.s32 %v1997, %v1999
    %v2001 = vrot.slane %v1994, %v2000
    %2002 = vrot.lane.b32.xlu0 %v2001, 96
    %v2003 = vpop.permute.xlu0 %2002
    %v2005 = vmul.f32 %v1881, %v2003
    %v2007 = vlaneseq
    %v2008 = vshrl.u32 %v2007, 7
    %v2009 = vsub.s32 0, %v2008
    %v2010 = vrot.slane %v2005, %v2009
    %v2012 = vmul.f32 %v1876, %v2010
    %v2013 = vmul.f32 %v1877, %v2010
    %v2014 = vmul.f32 %v1878, %v2010
    %v2015 = vmul.f32 %v1879, %v2010
    %v2016 = vmul.f32 %v1978, %v2005
    %v2017 = vsub.f32 %v1883, %v2016
    %v2019 = vlaneseq
    %v2020 = vshrl.u32 %v2019, 7
    %v2021 = vsub.s32 0, %v2020
    %v2022 = vrot.slane %v2017, %v2021
    %v2024 = vadd.f32 %v2012, %v2022
    %v2025 = vadd.f32 %v2013, %v2022
    %v2026 = vadd.f32 %v2014, %v2022
    %v2027 = vadd.f32 %v2015, %v2022
    %v2028 = vpack.c.bf16 %v2025, %v2024
    %v2029 = vpack.c.bf16 %v2027, %v2026
    %s2030 = scalar_lea.vmem %s7, 16
    %v2031 = vld [vmem:[%s2030] sm:$0xf]
    %v2032 = vld [vmem:[%s2030 + $0x4] sm:$0xf]
    %v2033 = vld [vmem:[%s2030 + $0x8] sm:$0xf]
    %v2034 = vld [vmem:[%s2030 + $0xc] sm:$0xf]
    %s2035 = scalar_lea.vmem [#allocation7], 1
    %v2036 = vld [vmem:[%s2035] sm:$0x1]
    %v2038 = vlaneseq
    %v2039 = vshrl.u32 %v2038, 7
    %v2040 = vsub.s32 0, %v2039
    %v2041 = vrot.slane %v2036, %v2040
    %v2047 = vunpack.c.l.b16 %v2031
    %v2048 = vunpack.c.l.b16 %v2032
    %v2049 = vunpack.c.l.b16 %v2033
    %v2050 = vunpack.c.l.b16 %v2034
    %v2051 = vpack.c.b16 %v2048, %v2047
    %v2052 = vpack.c.b16 %v2050, %v2049
    %v2056 = vsel %vm178, %v2028, 0
    %v2059 = vsel %vm178, %v2029, 0
    %2061 = vmatprep.subr.bf16.mxu0 0
    %2062 = vmatpush1.bf16.msra.mxu0 %v2051
    %2063 = vmatprep.subr.bf16.mxu0 0
    %2064 = vmatpush1.bf16.msra.mxu0 %v2052
    %2065 = vmatprep.subr.bf16.mxu0 0
    %2066 = vmatpush1.bf16.msra.mxu0 0
    %2067 = vmatprep.subr.bf16.mxu0 0
    %2068 = vmatpush1.bf16.msra.mxu0 0
    %2069 = vmatprep.subr.bf16.mxu0 0
    %2070 = vmatpush1.bf16.msra.mxu0 0
    %2071 = vmatprep.subr.bf16.mxu0 0
    %2072 = vmatpush1.bf16.msra.mxu0 0
    %2073 = vmatprep.subr.bf16.mxu0 0
    %2074 = vmatpush1.bf16.msra.mxu0 0
    %2075 = vmatprep.subr.bf16.mxu0 0
    %2076 = vmatpush1.bf16.msra.mxu0 0
    %2077 = vmatprep.subr.bf16.mxu0 0
    %2078 = vmatpush1.bf16.msra.mxu0 0
    %2079 = vmatprep.subr.bf16.mxu0 0
    %2080 = vmatpush1.bf16.msra.mxu0 0
    %2081 = vmatprep.subr.bf16.mxu0 0
    %2082 = vmatpush1.bf16.msra.mxu0 0
    %2083 = vmatprep.subr.bf16.mxu0 0
    %2084 = vmatpush1.bf16.msra.mxu0 0
    %2085 = vmatprep.subr.bf16.mxu0 0
    %2086 = vmatpush1.bf16.msra.mxu0 0
    %2087 = vmatprep.subr.bf16.mxu0 0
    %2088 = vmatpush1.bf16.msra.mxu0 0
    %2089 = vmatprep.subr.bf16.mxu0 0
    %2090 = vmatpush1.bf16.msra.mxu0 0
    %2091 = vmatprep.subr.bf16.mxu0 0
    %2092 = vmatpush1.bf16.msra.mxu0 0
    %2093 = vmatprep.mubr.bf16.mxu0 0
    %2094 = vmatmul.mubr.bf16.gmra.mrb[0].mxu0 %v2056
    %v2095 = vpop.f32.mrb[0].mxu0
    %v2096 = vadd.f32 %v2041, %v2095
    %v2097 = vpop.f32.mrb[0].mxu0
    %v2098 = vpop.f32.mrb[0].mxu0
    %v2099 = vadd.f32 %v2041, %v2098
    %v2100 = vpop.f32.mrb[0].mxu0
    %2101 = vmatprep.mubr.bf16.mxu0 0
    %2102 = vmatmul.mubr.bf16.gmra.mrb[0].mxu0 %v2059
    %v2103 = vpop.f32.mrb[0].mxu0
    %v2104 = vadd.f32 %v2041, %v2103
    %v2105 = vpop.f32.mrb[0].mxu0
    %v2106 = vpop.f32.mrb[0].mxu0
    %v2107 = vadd.f32 %v2041, %v2106
    %v2108 = vpop.f32.mrb[0].mxu0
    %2109 = vdwg.mxu0
    %v2110 = vmul.f32 %v2096, 0.5
    %v2111 = vmul.f32 %v2099, 0.5
    %v2112 = vmul.f32 %v2104, 0.5
    %v2113 = vmul.f32 %v2107, 0.5
    %v2114 = vmul.f32 %v2096, 0.70710677
    %v2115 = vmul.f32 %v2099, 0.70710677
    %v2116 = vmul.f32 %v2104, 0.70710677
    %v2117 = vmul.f32 %v2107, 0.70710677
    %vm2118 = vcmp.ge.f32.partialorder %v2114, 0.0
    %vm2119 = vcmp.ge.f32.partialorder %v2115, 0.0
    %vm2120 = vcmp.ge.f32.partialorder %v2116, 0.0
    %vm2121 = vcmp.ge.f32.partialorder %v2117, 0.0
    %v2122 = vsel %vm2118, 1.0, -1.0
    %v2123 = vsel %vm2119, 1.0, -1.0
    %v2124 = vsel %vm2120, 1.0, -1.0
    %v2125 = vsel %vm2121, 1.0, -1.0
    %v2126 = vand.u32 2147483647, %v2114
    %v2127 = vand.u32 2147483647, %v2115
    %v2128 = vand.u32 2147483647, %v2116
    %v2129 = vand.u32 2147483647, %v2117
    %v2130 = vmul.f32 %v2126, 0.3275911
    %v2131 = vmul.f32 %v2127, 0.3275911
    %v2132 = vmul.f32 %v2128, 0.3275911
    %v2133 = vmul.f32 %v2129, 0.3275911
    %v2134 = vadd.f32 %v2130, 1.0
    %v2135 = vadd.f32 %v2131, 1.0
    %v2136 = vadd.f32 %v2132, 1.0
    %v2137 = vadd.f32 %v2133, 1.0
    %v2138 = vrcp.pop %v2134
    %v2139 = vmul.f32 1.0, %v2138
    %v2140 = vrcp.pop %v2135
    %v2141 = vmul.f32 1.0, %v2140
    %v2142 = vrcp.pop %v2136
    %v2143 = vmul.f32 1.0, %v2142
    %v2144 = vrcp.pop %v2137
    %v2145 = vmul.f32 1.0, %v2144
    %v2146 = vmul.f32 %v2139, 1.0614054
    %v2147 = vmul.f32 %v2141, 1.0614054
    %v2148 = vmul.f32 %v2143, 1.0614054
    %v2149 = vmul.f32 %v2145, 1.0614054
    %v2150 = vadd.f32 %v2146, -1.4531521
    %v2151 = vadd.f32 %v2147, -1.4531521
    %v2152 = vadd.f32 %v2148, -1.4531521
    %v2153 = vadd.f32 %v2149, -1.4531521
    %v2154 = vmul.f32 %v2150, %v2139
    %v2155 = vmul.f32 %v2151, %v2141
    %v2156 = vmul.f32 %v2152, %v2143
    %v2157 = vmul.f32 %v2153, %v2145
    %v2158 = vadd.f32 %v2154, 1.4214138
    %v2159 = vadd.f32 %v2155, 1.4214138
    %v2160 = vadd.f32 %v2156, 1.4214138
    %v2161 = vadd.f32 %v2157, 1.4214138
    %v2162 = vmul.f32 %v2158, %v2139
    %v2163 = vmul.f32 %v2159, %v2141
    %v2164 = vmul.f32 %v2160, %v2143
    %v2165 = vmul.f32 %v2161, %v2145
    %v2166 = vadd.f32 %v2162, -0.28449672
    %v2167 = vadd.f32 %v2163, -0.28449672
    %v2168 = vadd.f32 %v2164, -0.28449672
    %v2169 = vadd.f32 %v2165, -0.28449672
    %v2170 = vmul.f32 %v2166, %v2139
    %v2171 = vmul.f32 %v2167, %v2141
    %v2172 = vmul.f32 %v2168, %v2143
    %v2173 = vmul.f32 %v2169, %v2145
    %v2174 = vadd.f32 %v2170, 0.2548296
    %v2175 = vadd.f32 %v2171, 0.2548296
    %v2176 = vadd.f32 %v2172, 0.2548296
    %v2177 = vadd.f32 %v2173, 0.2548296
    %v2178 = vmul.f32 %v2174, %v2139
    %v2179 = vmul.f32 %v2175, %v2141
    %v2180 = vmul.f32 %v2176, %v2143
    %v2181 = vmul.f32 %v2177, %v2145
    %v2182 = vsub.f32 0.0, %v2126
    %v2183 = vsub.f32 0.0, %v2127
    %v2184 = vsub.f32 0.0, %v2128
    %v2185 = vsub.f32 0.0, %v2129
    %v2186 = vmul.f32 %v2182, %v2126
    %v2187 = vmul.f32 %v2183, %v2127
    %v2188 = vmul.f32 %v2184, %v2128
    %v2189 = vmul.f32 %v2185, %v2129
    %v2190 = vmul.f32 %v2186, 1.442695
    %v2191 = vpow.pop %v2190
    %v2192 = vmul.f32 %v2187, 1.442695
    %v2193 = vpow.pop %v2192
    %v2194 = vmul.f32 %v2188, 1.442695
    %v2195 = vpow.pop %v2194
    %v2196 = vmul.f32 %v2189, 1.442695
    %v2197 = vpow.pop %v2196
    %v2198 = vmul.f32 %v2178, %v2191
    %v2199 = vmul.f32 %v2179, %v2193
    %v2200 = vmul.f32 %v2180, %v2195
    %v2201 = vmul.f32 %v2181, %v2197
    %v2202 = vsub.f32 1.0, %v2198
    %v2203 = vsub.f32 1.0, %v2199
    %v2204 = vsub.f32 1.0, %v2200
    %v2205 = vsub.f32 1.0, %v2201
    %v2206 = vmul.f32 %v2122, %v2202
    %v2207 = vmul.f32 %v2123, %v2203
    %v2208 = vmul.f32 %v2124, %v2204
    %v2209 = vmul.f32 %v2125, %v2205
    %v2210 = vadd.f32 %v2206, 1.0
    %v2211 = vadd.f32 %v2207, 1.0
    %v2212 = vadd.f32 %v2208, 1.0
    %v2213 = vadd.f32 %v2209, 1.0
    %v2214 = vmul.f32 %v2110, %v2210
    %v2215 = vmul.f32 %v2111, %v2211
    %v2216 = vmul.f32 %v2112, %v2212
    %v2217 = vmul.f32 %v2113, %v2213
    %v2218 = vpack.c.bf16 %v2215, %v2214
    %v2219 = vpack.c.bf16 %v2217, %v2216
    %s2220 = scalar_lea.vmem %s9, 32
    %v2221 = vld [vmem:[%s2220] sm:$0xf]
    %v2222 = vld [vmem:[%s2220 + $0x4] sm:$0xf]
    %v2223 = vld [vmem:[%s2220 + $0x8] sm:$0xf]
    %v2224 = vld [vmem:[%s2220 + $0xc] sm:$0xf]
    %v2225 = vld [vmem:[%s2220 + $0x10] sm:$0xf]
    %v2226 = vld [vmem:[%s2220 + $0x14] sm:$0xf]
    %v2227 = vld [vmem:[%s2220 + $0x18] sm:$0xf]
    %v2228 = vld [vmem:[%s2220 + $0x1c] sm:$0xf]
    %s2229 = scalar_lea.vmem %s10, 1
    %v2230 = vld [vmem:[%s2229] sm:$0x1]
    %v2232 = vlaneseq
    %v2233 = vshrl.u32 %v2232, 7
    %v2234 = vsub.s32 0, %v2233
    %v2235 = vrot.slane %v2230, %v2234
    %v2245 = vunpack.c.l.b16 %v2221
    %v2246 = vunpack.c.l.b16 %v2222
    %v2247 = vunpack.c.l.b16 %v2223
    %v2248 = vunpack.c.l.b16 %v2224
    %v2249 = vunpack.c.l.b16 %v2225
    %v2250 = vunpack.c.l.b16 %v2226
    %v2251 = vunpack.c.l.b16 %v2227
    %v2252 = vunpack.c.l.b16 %v2228
    %v2253 = vpack.c.b16 %v2246, %v2245
    %v2254 = vpack.c.b16 %v2248, %v2247
    %v2255 = vpack.c.b16 %v2250, %v2249
    %v2256 = vpack.c.b16 %v2252, %v2251
    %v2262 = vsel %vm1157, %v2218, 0
    %v2265 = vsel %vm1157, %v2219, 0
    %2267 = vmatprep.subr.bf16.mxu0 0
    %2268 = vmatpush1.bf16.msra.mxu0 %v2253
    %2269 = vmatprep.subr.bf16.mxu0 0
    %2270 = vmatpush1.bf16.msra.mxu0 %v2254
    %2271 = vmatprep.subr.bf16.mxu0 0
    %2272 = vmatpush1.bf16.msra.mxu0 %v2255
    %2273 = vmatprep.subr.bf16.mxu0 0
    %2274 = vmatpush1.bf16.msra.mxu0 %v2256
    %2275 = vmatprep.subr.bf16.mxu0 0
    %2276 = vmatpush1.bf16.msra.mxu0 0
    %2277 = vmatprep.subr.bf16.mxu0 0
    %2278 = vmatpush1.bf16.msra.mxu0 0
    %2279 = vmatprep.subr.bf16.mxu0 0
    %2280 = vmatpush1.bf16.msra.mxu0 0
    %2281 = vmatprep.subr.bf16.mxu0 0
    %2282 = vmatpush1.bf16.msra.mxu0 0
    %2283 = vmatprep.subr.bf16.mxu0 0
    %2284 = vmatpush1.bf16.msra.mxu0 0
    %2285 = vmatprep.subr.bf16.mxu0 0
    %2286 = vmatpush1.bf16.msra.mxu0 0
    %2287 = vmatprep.subr.bf16.mxu0 0
    %2288 = vmatpush1.bf16.msra.mxu0 0
    %2289 = vmatprep.subr.bf16.mxu0 0
    %2290 = vmatpush1.bf16.msra.mxu0 0
    %2291 = vmatprep.subr.bf16.mxu0 0
    %2292 = vmatpush1.bf16.msra.mxu0 0
    %2293 = vmatprep.subr.bf16.mxu0 0
    %2294 = vmatpush1.bf16.msra.mxu0 0
    %2295 = vmatprep.subr.bf16.mxu0 0
    %2296 = vmatpush1.bf16.msra.mxu0 0
    %2297 = vmatprep.subr.bf16.mxu0 0
    %2298 = vmatpush1.bf16.msra.mxu0 0
    %2299 = vmatprep.mubr.bf16.mxu0 0
    %2300 = vmatmul.mubr.bf16.gmra.mrb[0].mxu0 %v2262
    %v2301 = vpop.f32.mrb[0].mxu0
    %v2302 = vadd.f32 %v2235, %v2301
    %v2303 = vpop.f32.mrb[0].mxu0
    %v2304 = vpop.f32.mrb[0].mxu0
    %v2305 = vadd.f32 %v2235, %v2304
    %v2306 = vpop.f32.mrb[0].mxu0
    %2307 = vmatprep.mubr.bf16.mxu0 0
    %2308 = vmatmul.mubr.bf16.gmra.mrb[0].mxu0 %v2265
    %v2309 = vpop.f32.mrb[0].mxu0
    %v2310 = vadd.f32 %v2235, %v2309
    %v2311 = vpop.f32.mrb[0].mxu0
    %v2312 = vpop.f32.mrb[0].mxu0
    %v2313 = vadd.f32 %v2235, %v2312
    %v2314 = vpop.f32.mrb[0].mxu0
    %2315 = vdwg.mxu0
    %v2316 = vadd.f32 %v2024, %v2302
    %v2317 = vadd.f32 %v2025, %v2305
    %v2318 = vadd.f32 %v2026, %v2310
    %v2319 = vadd.f32 %v2027, %v2313
    %s2320 = scalar_lea.vmem %s11, 1
    %v2321 = vld [vmem:[%s2320] sm:$0x1]
    %s2322 = scalar_lea.vmem %s12, 1
    %v2323 = vld [vmem:[%s2322] sm:$0x1]
    %v2324 = vmul.f32 %v2316, %v2316
    %v2325 = vmul.f32 %v2317, %v2317
    %v2326 = vmul.f32 %v2318, %v2318
    %v2327 = vmul.f32 %v2319, %v2319
    %2332 = vrot.lane.b32.xlu0 %v2324, 32
    %v2333 = vpop.permute.xlu0 %2332
    %2334 = vrot.lane.b32.xlu0 %v2325, 32
    %v2335 = vpop.permute.xlu0 %2334
    %2336 = vrot.lane.b32.xlu0 %v2326, 32
    %v2337 = vpop.permute.xlu0 %2336
    %2338 = vrot.lane.b32.xlu0 %v2327, 32
    %v2339 = vpop.permute.xlu0 %2338
    %v2344 = vsel %vm178, %v2316, %v2333
    %v2345 = vsel %vm178, %v2317, %v2335
    %v2346 = vsel %vm178, %v2318, %v2337
    %v2347 = vsel %vm178, %v2319, %v2339
    %2348 = vmatprep.subr.mxu0 0.0
    %2349 = vmatpush1.msra.mxu0 %v2344
    %2350 = vmatprep.subr.mxu0 0.0
    %2351 = vmatpush1.msra.mxu0 %v2345
    %2352 = vmatprep.subr.mxu0 0.0
    %2353 = vmatpush1.msra.mxu0 %v2346
    %2354 = vmatprep.subr.mxu0 0.0
    %2355 = vmatpush1.msra.mxu0 %v2347
    %2356 = vmatprep.subr.mxu0 0.0
    %2357 = vmatpush1.msra.mxu0 0.0
    %2358 = vmatprep.subr.mxu0 0.0
    %2359 = vmatpush1.msra.mxu0 0.0
    %2360 = vmatprep.subr.mxu0 0.0
    %2361 = vmatpush1.msra.mxu0 0.0
    %2362 = vmatprep.subr.mxu0 0.0
    %2363 = vmatpush1.msra.mxu0 0.0
    %2364 = vmatprep.subr.mxu0 0.0
    %2365 = vmatpush1.msra.mxu0 0.0
    %2366 = vmatprep.subr.mxu0 0.0
    %2367 = vmatpush1.msra.mxu0 0.0
    %2368 = vmatprep.subr.mxu0 0.0
    %2369 = vmatpush1.msra.mxu0 0.0
    %2370 = vmatprep.subr.mxu0 0.0
    %2371 = vmatpush1.msra.mxu0 0.0
    %2372 = vmatprep.subr.mxu0 0.0
    %2373 = vmatpush1.msra.mxu0 0.0
    %2374 = vmatprep.subr.mxu0 0.0
    %2375 = vmatpush1.msra.mxu0 0.0
    %2376 = vmatprep.subr.mxu0 0.0
    %2377 = vmatpush1.msra.mxu0 0.0
    %2378 = vmatprep.subr.mxu0 0.0
    %2379 = vmatpush1.msra.mxu0 0.0
    %2380 = vmatprep.subr.mxu0 0.0
    %2381 = vmatpush1.msra.mxu0 0.0
    %2382 = vmatprep.subr.mxu0 0.0
    %2383 = vmatpush1.msra.mxu0 0.0
    %2384 = vmatprep.subr.mxu0 0.0
    %2385 = vmatpush1.msra.mxu0 0.0
    %2386 = vmatprep.subr.mxu0 0.0
    %2387 = vmatpush1.msra.mxu0 0.0
    %2388 = vmatprep.subr.mxu0 0.0
    %2389 = vmatpush1.msra.mxu0 0.0
    %2390 = vmatprep.subr.mxu0 0.0
    %2391 = vmatpush1.msra.mxu0 0.0
    %2392 = vmatprep.subr.mxu0 0.0
    %2393 = vmatpush1.msra.mxu0 0.0
    %2394 = vmatprep.subr.mxu0 0.0
    %2395 = vmatpush1.msra.mxu0 0.0
    %2396 = vmatprep.subr.mxu0 0.0
    %2397 = vmatpush1.msra.mxu0 0.0
    %2398 = vmatprep.subr.mxu0 0.0
    %2399 = vmatpush1.msra.mxu0 0.0
    %2400 = vmatprep.subr.mxu0 0.0
    %2401 = vmatpush1.msra.mxu0 0.0
    %2402 = vmatprep.subr.mxu0 0.0
    %2403 = vmatpush1.msra.mxu0 0.0
    %2404 = vmatprep.subr.mxu0 0.0
    %2405 = vmatpush1.msra.mxu0 0.0
    %2406 = vmatprep.subr.mxu0 0.0
    %2407 = vmatpush1.msra.mxu0 0.0
    %2408 = vmatprep.subr.mxu0 0.0
    %2409 = vmatpush1.msra.mxu0 0.0
    %2410 = vmatprep.subr.mxu0 0.0
    %2411 = vmatpush1.msra.mxu0 0.0
    %2412 = vmatprep.mubr.f32.mxu0 0.0
    %2413 = vmatmul.mubr.f32.gmra.mrb[0].mxu0 %v806
    %v2414 = vpop.f32.mrb[0].mxu0
    %v2415 = vadd.f32 0.0, %v2414
    %v2416 = vpop.f32.mrb[0].mxu0
    %2417 = vdwg.mxu0
    %v2418 = vmul.f32 %v2415, 0.03125
    %v2419 = vmul.f32 %v2418, %v2418
    %2421 = vrot.lane.b32.xlu0 %v2419, 32
    %v2422 = vpop.permute.xlu0 %2421
    %v2424 = vsub.f32 %v2418, %v2422
    %v2425 = vadd.f32 %v2424, 1e-05
    %v2426 = vrsqrt.pop %v2425
    %v2429 = vunpack.c.l.s4 1966171168
    %v2430 = vunpack.c.0.s8 %v2429
    %v2431 = vlaneseq
    %v2432 = vshrl.u32 %v2431, 7
    %v2433 = vsub.s32 %v2430, %v2432
    %v2434 = vrot.slane %v2426, %v2433
    %v2436 = vunpack.c.l.s4 1966171168
    %v2437 = vunpack.c.0.s8 %v2436
    %v2438 = vlaneseq
    %v2439 = vshrl.u32 %v2438, 7
    %v2440 = vsub.s32 %v2437, %v2439
    %v2441 = vrot.slane %v2434, %v2440
    %2442 = vrot.lane.b32.xlu0 %v2441, 96
    %v2443 = vpop.permute.xlu0 %2442
    %v2445 = vmul.f32 %v2321, %v2443
    %v2447 = vlaneseq
    %v2448 = vshrl.u32 %v2447, 7
    %v2449 = vsub.s32 0, %v2448
    %v2450 = vrot.slane %v2445, %v2449
    %v2452 = vmul.f32 %v2316, %v2450
    %v2453 = vmul.f32 %v2317, %v2450
    %v2454 = vmul.f32 %v2318, %v2450
    %v2455 = vmul.f32 %v2319, %v2450
    %v2456 = vmul.f32 %v2418, %v2445
    %v2457 = vsub.f32 %v2323, %v2456
    %v2459 = vlaneseq
    %v2460 = vshrl.u32 %v2459, 7
    %v2461 = vsub.s32 0, %v2460
    %v2462 = vrot.slane %v2457, %v2461
    %v2464 = vadd.f32 %v2452, %v2462
    %v2465 = vadd.f32 %v2453, %v2462
    %v2466 = vadd.f32 %v2454, %v2462
    %v2467 = vadd.f32 %v2455, %v2462
    %2468 = vst.msk [vmem:[%s17] sm:$0xff] %vm178, %v2464
    %2469 = vst.msk [vmem:[%s17 + $0x8] sm:$0xff] %vm178, %v2465
    %2470 = vst.msk [vmem:[%s17 + $0x10] sm:$0xff] %vm178, %v2466
    %2471 = vst.msk [vmem:[%s17 + $0x18] sm:$0xff] %vm178, %v2467
    // Predicated region
    $region86: #{tst_encoder_pallas.1} parent=1 // pred_check
      _
    $region87: #{tst_encoder_pallas.1} parent=1 // pred_check_branch
      %2473 = sbr.rel (0) target = $region89
    $region88: #{tst_encoder_pallas.1} parent=1 // pred_region
      _
    $region89: #{tst_encoder_pallas.1} parent=1 // pred_fallthru
      _
    // Predicated region
    $region90: #{tst_encoder_pallas.1} parent=1 // pred_check
      _
    $region91: #{tst_encoder_pallas.1} parent=1 // pred_check_branch
      %2475 = sbr.rel (0) target = $region93
    $region92: #{tst_encoder_pallas.1} parent=1 // pred_region
      _
    $region93: #{tst_encoder_pallas.1} parent=1 // pred_fallthru
      _
    %2476 = vsyncpa [#allocation3], 1
    %2477 = vsyncpa [#allocation5], 1
    %2478 = vsyncpa [#allocation8], 1

</llo_original>
